<compile_context>
chip_gen: v7x
topology: tpu7x:2x2x1
jax: 0.10.0
libtpu: 0.0.40
codegen_flags: <defaults>
</compile_context>

<pallas_src>
import math

import numpy as np
import jax
import jax.numpy as jnp
from jax.experimental import pallas as pl
from jax.experimental.pallas import tpu as pltpu

# ---- module hyper-parameters (small, consistent with FPEBlock constraints) ----
N, H, W = 2, 16, 16
INPLANES = 8             # must be divisible by scales
OUTPLANES = 8            # == INPLANES so the residual works with downsample=None
T = 1
SCALES = 4
CB = INPLANES * T        # bottleneck planes
G = CB // SCALES         # channels per scale group
EPS = 1e-5               # BatchNorm eps
LANE_PAD = 128           # 128-lane-aligned zero-pad around the flattened H*W axis


def _eca_kernel_size(channel, b=1, gamma=2):
    k = int(abs((math.log(channel, 2) + b) / gamma))
    return k if k % 2 else k + 1


def bn_affine(gamma, beta, mean, var):
    scale = gamma / jnp.sqrt(var + EPS)
    shift = beta - mean * scale
    return scale, shift


def _make_fpe_kernel(width):
    """Build the kernel; `width` (= W) sets the row stride on the flattened lanes."""

    def kernel(x_ref, w1_ref, b1_ref, dwm_ref, b2_ref, w3_ref, b3_ref,
               eca_ref, out_ref):
        cin, hw = x_ref.shape          # (Cin, H*W) -- lane-dense
        cb = w1_ref.shape[1]           # bottleneck planes
        cout = b3_ref.shape[0]         # output planes
        scales, _, g, _ = dwm_ref.shape

        x = x_ref[...]                 # (Cin, HW), dense

        # ---- conv1 (1x1) + bn1 (scale folded into w1) + relu ----
        # K = Cin = 8 contraction as VPU broadcast-MACs, not an MXU matmul.
        w1 = w1_ref[...]               # (Cin, CB, 1)
        acc1 = w1[0] * x[0:1, :]       # (CB,1) * (1,HW) -> (CB,HW)
        for ci in range(1, cin):
            acc1 = acc1 + w1[ci] * x[ci:ci + 1, :]
        h1 = jnp.maximum(acc1 + b1_ref[...], 0.0)       # (CB, HW)

        # ---- chained per-scale depthwise 3x3 + bn2 + relu, in-register ----
        # dwm[s, t] already holds bn2_scale * tap_weight * spatial_validity_mask,
        # so each tap is one multiply-add on a lane-shifted window; no VMEM
        # scratch round trip.  Zero-pad is 128-lane aligned (cheap concat).
        zpad = jnp.zeros((g, LANE_PAD), jnp.float32)
        ys = []
        prev = None
        for s in range(scales):
            chunk = h1[s * g:(s + 1) * g, :]            # (G, HW)
            if s > 0:
                chunk = chunk + prev
            padded = jnp.concatenate([zpad, chunk, zpad], axis=1)
            acc = jnp.zeros((g, hw), jnp.float32)
            for t in range(9):
                off = (t // 3 - 1) * width + (t % 3 - 1)
                if off == 0:
                    win = chunk
                else:
                    win = padded[:, LANE_PAD + off:LANE_PAD + off + hw]
                acc = acc + dwm_ref[s, t] * win         # fused mask+scale+tap
            y = jnp.maximum(acc + b2_ref[s], 0.0)       # bn2 shift + relu
            ys.append(y)
            prev = y

        # ---- conv3 (1x1) + bn3: one fused contraction over all CB channels ----
        w3 = w3_ref[...]                                # (CB, OUT, 1)
        o2 = None
        for c in range(cb):
            contrib = w3[c] * ys[c // g][c % g:c % g + 1, :]   # (OUT, HW)
            o2 = contrib if o2 is None else o2 + contrib
        o2 = o2 + b3_ref[...]                           # (OUT, HW)

        # ---- ECA: global avg pool + banded 1-D channel conv + sigmoid gate ----
        pooled = jnp.mean(o2, axis=1, keepdims=True)    # (OUT, 1), lane reduce
        eca_m = eca_ref[...]                            # (OUT, OUT, 1) band table
        att = None
        for c in range(cout):
            term = eca_m[c] * pooled[c:c + 1, :]        # (OUT,1) * (1,1)
            att = term if att is None else att + term
        att = jax.nn.sigmoid(att)                       # (OUT, 1)
        o3 = o2 * att                                   # lane-broadcast

        # ---- residual add + relu; dense (8, 256) unmasked store ----
        out_ref[...] = jnp.maximum(o3 + x, 0.0)

    return kernel


def fpe_block(x_nchw, params):
    n, cin, h, w = x_nchw.shape
    w1_k, b1_k, dwm, b2_k, w3_k, b3_k, eca_k = params
    hw = h * w
    cout = b3_k.shape[0]

    x_flat = x_nchw.reshape(n, cin, hw)     # free reshape; NCHW layout kept

    def rep(a):                             # weight replicated across the grid
        zeros = (0,) * a.ndim
        return pl.BlockSpec(a.shape, lambda i: zeros)

    out_flat = pl.pallas_call(
        _make_fpe_kernel(w),
        grid=(n,),                          # batch-parallel; shards across TCs on v7x
        out_shape=jax.ShapeDtypeStruct((n, cout, hw), jnp.float32),
        in_specs=[
            pl.BlockSpec((None, cin, hw), lambda i: (i, 0, 0)),
            rep(w1_k), rep(b1_k), rep(dwm), rep(b2_k),
            rep(w3_k), rep(b3_k), rep(eca_k),
        ],
        out_specs=pl.BlockSpec((None, cout, hw), lambda i: (i, 0, 0)),
        compiler_params=pltpu.CompilerParams(
            dimension_semantics=("parallel",)),
    )(x_flat, *params)
    return out_flat.reshape(n, cout, h, w)


if __name__ == "__main__":
    key = jax.random.PRNGKey(0)
    keys = jax.random.split(key, 20)

    # Input stays in PyTorch NCHW convention -- no transpose needed any more.
    x = jax.random.normal(keys[0], (N, INPLANES, H, W), jnp.float32)

    # conv1: torch weight (CB, INPLANES, 1, 1) -> (CB, INPLANES); bn1 folded.
    w1 = 0.1 * jax.random.normal(keys[1], (CB, INPLANES), jnp.float32)
    s1, sh1 = bn_affine(1.0 + 0.1 * jax.random.normal(keys[2], (CB,)),
                        0.1 * jax.random.normal(keys[3], (CB,)),
                        0.1 * jax.random.normal(keys[4], (CB,)),
                        1.0 + 0.1 * jax.random.uniform(keys[5], (CB,)))
    w1_k = jnp.transpose(s1[:, None] * w1, (1, 0))[:, :, None]   # (Cin, CB, 1)
    b1_k = sh1[:, None]                                          # (CB, 1)

    # depthwise 3x3 per scale: torch weight (G, 1, 3, 3); bn2 scale folded.
    dww = 0.1 * jax.random.normal(keys[6], (SCALES, G, 3, 3), jnp.float32)
    s2, sh2 = bn_affine(1.0 + 0.1 * jax.random.normal(keys[7], (SCALES, G)),
                        0.1 * jax.random.normal(keys[8], (SCALES, G)),
                        0.1 * jax.random.normal(keys[9], (SCALES, G)),
                        1.0 + 0.1 * jax.random.uniform(keys[10], (SCALES, G)))
    # Spatial validity mask of each of the 9 taps over the flattened H*W axis
    # (zero wherever the 3x3 window would read outside the H x W image).
    hh, ww = np.meshgrid(np.arange(H), np.arange(W), indexing="ij")
    hh, ww = hh.reshape(-1), ww.reshape(-1)
    mask = np.zeros((9, H * W), np.float32)
    for t in range(9):
        oh, ow = t // 3 - 1, t % 3 - 1
        mask[t] = ((hh + oh >= 0) & (hh + oh < H) &
                   (ww + ow >= 0) & (ww + ow < W)).astype(np.float32)
    mask = jnp.asarray(mask)
    dww_t = jnp.transpose(dww.reshape(SCALES, G, 9), (0, 2, 1))  # (S, 9, G)
    dwm = (s2[:, None, :] * dww_t)[:, :, :, None] * mask[None, :, None, :]
    b2_k = sh2[:, :, None]                                       # (S, G, 1)

    # conv3: torch weight (OUTPLANES, CB, 1, 1) -> (OUTPLANES, CB); bn3 folded.
    w3 = 0.1 * jax.random.normal(keys[11], (OUTPLANES, CB), jnp.float32)
    s3, sh3 = bn_affine(1.0 + 0.1 * jax.random.normal(keys[12], (OUTPLANES,)),
                        0.1 * jax.random.normal(keys[13], (OUTPLANES,)),
                        0.1 * jax.random.normal(keys[14], (OUTPLANES,)),
                        1.0 + 0.1 * jax.random.uniform(keys[15], (OUTPLANES,)))
    w3_k = jnp.transpose(s3[:, None] * w3, (1, 0))[:, :, None]   # (CB, OUT, 1)
    b3_k = sh3[:, None]                                          # (OUT, 1)

    # eca: Conv1d(1, 1, ksz, padding=(ksz-1)//2, bias=False) over channels,
    # folded into a banded table M[c_src, c_out] = kw[c_src - c_out + pad].
    ksz = _eca_kernel_size(OUTPLANES)
    pad_e = (ksz - 1) // 2
    kw = np.asarray(0.5 * jax.random.normal(keys[16], (ksz,), jnp.float32))
    eca_np = np.zeros((OUTPLANES, OUTPLANES, 1), np.float32)
    for c in range(OUTPLANES):
        for o in range(OUTPLANES):
            t = c - o + pad_e
            if 0 <= t < ksz:
                eca_np[c, o, 0] = kw[t]
    eca_k = jnp.asarray(eca_np)

    params = (w1_k, b1_k, dwm, b2_k, w3_k, b3_k, eca_k)

    out = fpe_block(x, params)
    jax.block_until_ready(out)
    assert out.shape == (N, OUTPLANES, H, W)
    print("KERNEL_OK")
</pallas_src>

<mosaic_0001>
module attributes {stable_mosaic.version = 11 : i64} {
  func.func @kernel(%arg0: i32, %arg1: memref<1x8x256xf32, #tpu.memory_space<vmem>>, %arg2: memref<8x8x1xf32, #tpu.memory_space<vmem>>, %arg3: memref<8x1xf32, #tpu.memory_space<vmem>>, %arg4: memref<4x9x2x256xf32, #tpu.memory_space<vmem>>, %arg5: memref<4x2x1xf32, #tpu.memory_space<vmem>>, %arg6: memref<8x8x1xf32, #tpu.memory_space<vmem>>, %arg7: memref<8x1xf32, #tpu.memory_space<vmem>>, %arg8: memref<8x8x1xf32, #tpu.memory_space<vmem>>, %arg9: memref<1x8x256xf32, #tpu.memory_space<vmem>>) attributes {dimension_semantics = [#tpu.dimension_semantics<parallel>], iteration_bounds = array<i64: 2>, scalar_prefetch = 0 : i64, scratch_operands = 0 : i64, tpu.core_type = #tpu.core_type<tc>, window_params = [{transform_indices = @transform_0, window_bounds = array<i64: 1, 8, 256>}, {pipeline_mode = #tpu.pipeline_mode<synchronous>, transform_indices = @transform_1, window_bounds = array<i64: 8, 8, 1>}, {pipeline_mode = #tpu.pipeline_mode<synchronous>, transform_indices = @transform_2, window_bounds = array<i64: 8, 1>}, {pipeline_mode = #tpu.pipeline_mode<synchronous>, transform_indices = @transform_3, window_bounds = array<i64: 4, 9, 2, 256>}, {pipeline_mode = #tpu.pipeline_mode<synchronous>, transform_indices = @transform_4, window_bounds = array<i64: 4, 2, 1>}, {pipeline_mode = #tpu.pipeline_mode<synchronous>, transform_indices = @transform_5, window_bounds = array<i64: 8, 8, 1>}, {pipeline_mode = #tpu.pipeline_mode<synchronous>, transform_indices = @transform_6, window_bounds = array<i64: 8, 1>}, {pipeline_mode = #tpu.pipeline_mode<synchronous>, transform_indices = @transform_7, window_bounds = array<i64: 8, 8, 1>}, {transform_indices = @transform_8, window_bounds = array<i64: 1, 8, 256>}]} {
    %c0 = arith.constant 0 : index
    %c0_0 = arith.constant 0 : index
    %c0_1 = arith.constant 0 : index
    %0 = vector.load %arg1[%c0, %c0_0, %c0_1] : memref<1x8x256xf32, #tpu.memory_space<vmem>>, vector<1x8x256xf32>
    %1 = vector.shape_cast %0 : vector<1x8x256xf32> to vector<8x256xf32>
    %c0_2 = arith.constant 0 : index
    %c0_3 = arith.constant 0 : index
    %c0_4 = arith.constant 0 : index
    %2 = vector.load %arg2[%c0_2, %c0_3, %c0_4] : memref<8x8x1xf32, #tpu.memory_space<vmem>>, vector<8x8x1xf32>
    %3 = vector.extract_strided_slice %2 {offsets = [0, 0, 0], sizes = [1, 8, 1], strides = [1, 1, 1]} : vector<8x8x1xf32> to vector<1x8x1xf32>
    %4 = vector.shape_cast %3 : vector<1x8x1xf32> to vector<8x1xf32>
    %5 = vector.extract_strided_slice %1 {offsets = [0, 0], sizes = [1, 256], strides = [1, 1]} : vector<8x256xf32> to vector<1x256xf32>
    %6 = vector.broadcast %4 : vector<8x1xf32> to vector<8x256xf32>
    %7 = vector.broadcast %5 : vector<1x256xf32> to vector<8x256xf32>
    %8 = arith.mulf %6, %7 : vector<8x256xf32>
    %9 = vector.extract_strided_slice %2 {offsets = [1, 0, 0], sizes = [1, 8, 1], strides = [1, 1, 1]} : vector<8x8x1xf32> to vector<1x8x1xf32>
    %10 = vector.shape_cast %9 : vector<1x8x1xf32> to vector<8x1xf32>
    %11 = vector.extract_strided_slice %1 {offsets = [1, 0], sizes = [1, 256], strides = [1, 1]} : vector<8x256xf32> to vector<1x256xf32>
    %12 = vector.broadcast %10 : vector<8x1xf32> to vector<8x256xf32>
    %13 = vector.broadcast %11 : vector<1x256xf32> to vector<8x256xf32>
    %14 = arith.mulf %12, %13 : vector<8x256xf32>
    %15 = arith.addf %8, %14 : vector<8x256xf32>
    %16 = vector.extract_strided_slice %2 {offsets = [2, 0, 0], sizes = [1, 8, 1], strides = [1, 1, 1]} : vector<8x8x1xf32> to vector<1x8x1xf32>
    %17 = vector.shape_cast %16 : vector<1x8x1xf32> to vector<8x1xf32>
    %18 = vector.extract_strided_slice %1 {offsets = [2, 0], sizes = [1, 256], strides = [1, 1]} : vector<8x256xf32> to vector<1x256xf32>
    %19 = vector.broadcast %17 : vector<8x1xf32> to vector<8x256xf32>
    %20 = vector.broadcast %18 : vector<1x256xf32> to vector<8x256xf32>
    %21 = arith.mulf %19, %20 : vector<8x256xf32>
    %22 = arith.addf %15, %21 : vector<8x256xf32>
    %23 = vector.extract_strided_slice %2 {offsets = [3, 0, 0], sizes = [1, 8, 1], strides = [1, 1, 1]} : vector<8x8x1xf32> to vector<1x8x1xf32>
    %24 = vector.shape_cast %23 : vector<1x8x1xf32> to vector<8x1xf32>
    %25 = vector.extract_strided_slice %1 {offsets = [3, 0], sizes = [1, 256], strides = [1, 1]} : vector<8x256xf32> to vector<1x256xf32>
    %26 = vector.broadcast %24 : vector<8x1xf32> to vector<8x256xf32>
    %27 = vector.broadcast %25 : vector<1x256xf32> to vector<8x256xf32>
    %28 = arith.mulf %26, %27 : vector<8x256xf32>
    %29 = arith.addf %22, %28 : vector<8x256xf32>
    %30 = vector.extract_strided_slice %2 {offsets = [4, 0, 0], sizes = [1, 8, 1], strides = [1, 1, 1]} : vector<8x8x1xf32> to vector<1x8x1xf32>
    %31 = vector.shape_cast %30 : vector<1x8x1xf32> to vector<8x1xf32>
    %32 = vector.extract_strided_slice %1 {offsets = [4, 0], sizes = [1, 256], strides = [1, 1]} : vector<8x256xf32> to vector<1x256xf32>
    %33 = vector.broadcast %31 : vector<8x1xf32> to vector<8x256xf32>
    %34 = vector.broadcast %32 : vector<1x256xf32> to vector<8x256xf32>
    %35 = arith.mulf %33, %34 : vector<8x256xf32>
    %36 = arith.addf %29, %35 : vector<8x256xf32>
    %37 = vector.extract_strided_slice %2 {offsets = [5, 0, 0], sizes = [1, 8, 1], strides = [1, 1, 1]} : vector<8x8x1xf32> to vector<1x8x1xf32>
    %38 = vector.shape_cast %37 : vector<1x8x1xf32> to vector<8x1xf32>
    %39 = vector.extract_strided_slice %1 {offsets = [5, 0], sizes = [1, 256], strides = [1, 1]} : vector<8x256xf32> to vector<1x256xf32>
    %40 = vector.broadcast %38 : vector<8x1xf32> to vector<8x256xf32>
    %41 = vector.broadcast %39 : vector<1x256xf32> to vector<8x256xf32>
    %42 = arith.mulf %40, %41 : vector<8x256xf32>
    %43 = arith.addf %36, %42 : vector<8x256xf32>
    %44 = vector.extract_strided_slice %2 {offsets = [6, 0, 0], sizes = [1, 8, 1], strides = [1, 1, 1]} : vector<8x8x1xf32> to vector<1x8x1xf32>
    %45 = vector.shape_cast %44 : vector<1x8x1xf32> to vector<8x1xf32>
    %46 = vector.extract_strided_slice %1 {offsets = [6, 0], sizes = [1, 256], strides = [1, 1]} : vector<8x256xf32> to vector<1x256xf32>
    %47 = vector.broadcast %45 : vector<8x1xf32> to vector<8x256xf32>
    %48 = vector.broadcast %46 : vector<1x256xf32> to vector<8x256xf32>
    %49 = arith.mulf %47, %48 : vector<8x256xf32>
    %50 = arith.addf %43, %49 : vector<8x256xf32>
    %51 = vector.extract_strided_slice %2 {offsets = [7, 0, 0], sizes = [1, 8, 1], strides = [1, 1, 1]} : vector<8x8x1xf32> to vector<1x8x1xf32>
    %52 = vector.shape_cast %51 : vector<1x8x1xf32> to vector<8x1xf32>
    %53 = vector.extract_strided_slice %1 {offsets = [7, 0], sizes = [1, 256], strides = [1, 1]} : vector<8x256xf32> to vector<1x256xf32>
    %54 = vector.broadcast %52 : vector<8x1xf32> to vector<8x256xf32>
    %55 = vector.broadcast %53 : vector<1x256xf32> to vector<8x256xf32>
    %56 = arith.mulf %54, %55 : vector<8x256xf32>
    %57 = arith.addf %50, %56 : vector<8x256xf32>
    %c0_5 = arith.constant 0 : index
    %c0_6 = arith.constant 0 : index
    %58 = vector.load %arg3[%c0_5, %c0_6] : memref<8x1xf32, #tpu.memory_space<vmem>>, vector<8x1xf32>
    %59 = vector.broadcast %58 : vector<8x1xf32> to vector<8x256xf32>
    %60 = arith.addf %57, %59 : vector<8x256xf32>
    %cst = arith.constant 0.000000e+00 : f32
    %61 = vector.broadcast %cst : f32 to vector<8x256xf32>
    %62 = arith.maximumf %60, %61 : vector<8x256xf32>
    %cst_7 = arith.constant 0.000000e+00 : f32
    %63 = vector.broadcast %cst_7 : f32 to vector<2x128xf32>
    %64 = vector.extract_strided_slice %62 {offsets = [0, 0], sizes = [2, 256], strides = [1, 1]} : vector<8x256xf32> to vector<2x256xf32>
    %65 = tpu.concatenate %63, %64, %63 in 1 : vector<2x128xf32>, vector<2x256xf32>, vector<2x128xf32> -> vector<2x512xf32>
    %cst_8 = arith.constant 0.000000e+00 : f32
    %66 = vector.broadcast %cst_8 : f32 to vector<2x256xf32>
    %67 = vector.extract_strided_slice %65 {offsets = [0, 111], sizes = [2, 256], strides = [1, 1]} : vector<2x512xf32> to vector<2x256xf32>
    %c0_9 = arith.constant 0 : index
    %c0_10 = arith.constant 0 : index
    %c0_11 = arith.constant 0 : index
    %c0_12 = arith.constant 0 : index
    %68 = vector.load %arg4[%c0_9, %c0_10, %c0_11, %c0_12] : memref<4x9x2x256xf32, #tpu.memory_space<vmem>>, vector<1x1x2x256xf32>
    %69 = vector.shape_cast %68 : vector<1x1x2x256xf32> to vector<2x256xf32>
    %70 = arith.mulf %69, %67 : vector<2x256xf32>
    %71 = arith.addf %66, %70 : vector<2x256xf32>
    %72 = vector.extract_strided_slice %65 {offsets = [0, 112], sizes = [2, 256], strides = [1, 1]} : vector<2x512xf32> to vector<2x256xf32>
    %c0_13 = arith.constant 0 : index
    %c1 = arith.constant 1 : index
    %c0_14 = arith.constant 0 : index
    %c0_15 = arith.constant 0 : index
    %73 = vector.load %arg4[%c0_13, %c1, %c0_14, %c0_15] : memref<4x9x2x256xf32, #tpu.memory_space<vmem>>, vector<1x1x2x256xf32>
    %74 = vector.shape_cast %73 : vector<1x1x2x256xf32> to vector<2x256xf32>
    %75 = arith.mulf %74, %72 : vector<2x256xf32>
    %76 = arith.addf %71, %75 : vector<2x256xf32>
    %77 = vector.extract_strided_slice %65 {offsets = [0, 113], sizes = [2, 256], strides = [1, 1]} : vector<2x512xf32> to vector<2x256xf32>
    %c0_16 = arith.constant 0 : index
    %c2 = arith.constant 2 : index
    %c0_17 = arith.constant 0 : index
    %c0_18 = arith.constant 0 : index
    %78 = vector.load %arg4[%c0_16, %c2, %c0_17, %c0_18] : memref<4x9x2x256xf32, #tpu.memory_space<vmem>>, vector<1x1x2x256xf32>
    %79 = vector.shape_cast %78 : vector<1x1x2x256xf32> to vector<2x256xf32>
    %80 = arith.mulf %79, %77 : vector<2x256xf32>
    %81 = arith.addf %76, %80 : vector<2x256xf32>
    %82 = vector.extract_strided_slice %65 {offsets = [0, 127], sizes = [2, 256], strides = [1, 1]} : vector<2x512xf32> to vector<2x256xf32>
    %c0_19 = arith.constant 0 : index
    %c3 = arith.constant 3 : index
    %c0_20 = arith.constant 0 : index
    %c0_21 = arith.constant 0 : index
    %83 = vector.load %arg4[%c0_19, %c3, %c0_20, %c0_21] : memref<4x9x2x256xf32, #tpu.memory_space<vmem>>, vector<1x1x2x256xf32>
    %84 = vector.shape_cast %83 : vector<1x1x2x256xf32> to vector<2x256xf32>
    %85 = arith.mulf %84, %82 : vector<2x256xf32>
    %86 = arith.addf %81, %85 : vector<2x256xf32>
    %c0_22 = arith.constant 0 : index
    %c4 = arith.constant 4 : index
    %c0_23 = arith.constant 0 : index
    %c0_24 = arith.constant 0 : index
    %87 = vector.load %arg4[%c0_22, %c4, %c0_23, %c0_24] : memref<4x9x2x256xf32, #tpu.memory_space<vmem>>, vector<1x1x2x256xf32>
    %88 = vector.shape_cast %87 : vector<1x1x2x256xf32> to vector<2x256xf32>
    %89 = arith.mulf %88, %64 : vector<2x256xf32>
    %90 = arith.addf %86, %89 : vector<2x256xf32>
    %91 = vector.extract_strided_slice %65 {offsets = [0, 129], sizes = [2, 256], strides = [1, 1]} : vector<2x512xf32> to vector<2x256xf32>
    %c0_25 = arith.constant 0 : index
    %c5 = arith.constant 5 : index
    %c0_26 = arith.constant 0 : index
    %c0_27 = arith.constant 0 : index
    %92 = vector.load %arg4[%c0_25, %c5, %c0_26, %c0_27] : memref<4x9x2x256xf32, #tpu.memory_space<vmem>>, vector<1x1x2x256xf32>
    %93 = vector.shape_cast %92 : vector<1x1x2x256xf32> to vector<2x256xf32>
    %94 = arith.mulf %93, %91 : vector<2x256xf32>
    %95 = arith.addf %90, %94 : vector<2x256xf32>
    %96 = vector.extract_strided_slice %65 {offsets = [0, 143], sizes = [2, 256], strides = [1, 1]} : vector<2x512xf32> to vector<2x256xf32>
    %c0_28 = arith.constant 0 : index
    %c6 = arith.constant 6 : index
    %c0_29 = arith.constant 0 : index
    %c0_30 = arith.constant 0 : index
    %97 = vector.load %arg4[%c0_28, %c6, %c0_29, %c0_30] : memref<4x9x2x256xf32, #tpu.memory_space<vmem>>, vector<1x1x2x256xf32>
    %98 = vector.shape_cast %97 : vector<1x1x2x256xf32> to vector<2x256xf32>
    %99 = arith.mulf %98, %96 : vector<2x256xf32>
    %100 = arith.addf %95, %99 : vector<2x256xf32>
    %101 = vector.extract_strided_slice %65 {offsets = [0, 144], sizes = [2, 256], strides = [1, 1]} : vector<2x512xf32> to vector<2x256xf32>
    %c0_31 = arith.constant 0 : index
    %c7 = arith.constant 7 : index
    %c0_32 = arith.constant 0 : index
    %c0_33 = arith.constant 0 : index
    %102 = vector.load %arg4[%c0_31, %c7, %c0_32, %c0_33] : memref<4x9x2x256xf32, #tpu.memory_space<vmem>>, vector<1x1x2x256xf32>
    %103 = vector.shape_cast %102 : vector<1x1x2x256xf32> to vector<2x256xf32>
    %104 = arith.mulf %103, %101 : vector<2x256xf32>
    %105 = arith.addf %100, %104 : vector<2x256xf32>
    %106 = vector.extract_strided_slice %65 {offsets = [0, 145], sizes = [2, 256], strides = [1, 1]} : vector<2x512xf32> to vector<2x256xf32>
    %c0_34 = arith.constant 0 : index
    %c8 = arith.constant 8 : index
    %c0_35 = arith.constant 0 : index
    %c0_36 = arith.constant 0 : index
    %107 = vector.load %arg4[%c0_34, %c8, %c0_35, %c0_36] : memref<4x9x2x256xf32, #tpu.memory_space<vmem>>, vector<1x1x2x256xf32>
    %108 = vector.shape_cast %107 : vector<1x1x2x256xf32> to vector<2x256xf32>
    %109 = arith.mulf %108, %106 : vector<2x256xf32>
    %110 = arith.addf %105, %109 : vector<2x256xf32>
    %c0_37 = arith.constant 0 : index
    %c0_38 = arith.constant 0 : index
    %c0_39 = arith.constant 0 : index
    %111 = vector.load %arg5[%c0_37, %c0_38, %c0_39] : memref<4x2x1xf32, #tpu.memory_space<vmem>>, vector<1x2x1xf32>
    %112 = vector.shape_cast %111 : vector<1x2x1xf32> to vector<2x1xf32>
    %113 = vector.broadcast %112 : vector<2x1xf32> to vector<2x256xf32>
    %114 = arith.addf %110, %113 : vector<2x256xf32>
    %cst_40 = arith.constant 0.000000e+00 : f32
    %115 = vector.broadcast %cst_40 : f32 to vector<2x256xf32>
    %116 = arith.maximumf %114, %115 : vector<2x256xf32>
    %117 = vector.extract_strided_slice %62 {offsets = [2, 0], sizes = [2, 256], strides = [1, 1]} : vector<8x256xf32> to vector<2x256xf32>
    %118 = arith.addf %117, %116 : vector<2x256xf32>
    %119 = tpu.concatenate %63, %118, %63 in 1 : vector<2x128xf32>, vector<2x256xf32>, vector<2x128xf32> -> vector<2x512xf32>
    %cst_41 = arith.constant 0.000000e+00 : f32
    %120 = vector.broadcast %cst_41 : f32 to vector<2x256xf32>
    %121 = vector.extract_strided_slice %119 {offsets = [0, 111], sizes = [2, 256], strides = [1, 1]} : vector<2x512xf32> to vector<2x256xf32>
    %c1_42 = arith.constant 1 : index
    %c0_43 = arith.constant 0 : index
    %c0_44 = arith.constant 0 : index
    %c0_45 = arith.constant 0 : index
    %122 = vector.load %arg4[%c1_42, %c0_43, %c0_44, %c0_45] : memref<4x9x2x256xf32, #tpu.memory_space<vmem>>, vector<1x1x2x256xf32>
    %123 = vector.shape_cast %122 : vector<1x1x2x256xf32> to vector<2x256xf32>
    %124 = arith.mulf %123, %121 : vector<2x256xf32>
    %125 = arith.addf %120, %124 : vector<2x256xf32>
    %126 = vector.extract_strided_slice %119 {offsets = [0, 112], sizes = [2, 256], strides = [1, 1]} : vector<2x512xf32> to vector<2x256xf32>
    %c1_46 = arith.constant 1 : index
    %c1_47 = arith.constant 1 : index
    %c0_48 = arith.constant 0 : index
    %c0_49 = arith.constant 0 : index
    %127 = vector.load %arg4[%c1_46, %c1_47, %c0_48, %c0_49] : memref<4x9x2x256xf32, #tpu.memory_space<vmem>>, vector<1x1x2x256xf32>
    %128 = vector.shape_cast %127 : vector<1x1x2x256xf32> to vector<2x256xf32>
    %129 = arith.mulf %128, %126 : vector<2x256xf32>
    %130 = arith.addf %125, %129 : vector<2x256xf32>
    %131 = vector.extract_strided_slice %119 {offsets = [0, 113], sizes = [2, 256], strides = [1, 1]} : vector<2x512xf32> to vector<2x256xf32>
    %c1_50 = arith.constant 1 : index
    %c2_51 = arith.constant 2 : index
    %c0_52 = arith.constant 0 : index
    %c0_53 = arith.constant 0 : index
    %132 = vector.load %arg4[%c1_50, %c2_51, %c0_52, %c0_53] : memref<4x9x2x256xf32, #tpu.memory_space<vmem>>, vector<1x1x2x256xf32>
    %133 = vector.shape_cast %132 : vector<1x1x2x256xf32> to vector<2x256xf32>
    %134 = arith.mulf %133, %131 : vector<2x256xf32>
    %135 = arith.addf %130, %134 : vector<2x256xf32>
    %136 = vector.extract_strided_slice %119 {offsets = [0, 127], sizes = [2, 256], strides = [1, 1]} : vector<2x512xf32> to vector<2x256xf32>
    %c1_54 = arith.constant 1 : index
    %c3_55 = arith.constant 3 : index
    %c0_56 = arith.constant 0 : index
    %c0_57 = arith.constant 0 : index
    %137 = vector.load %arg4[%c1_54, %c3_55, %c0_56, %c0_57] : memref<4x9x2x256xf32, #tpu.memory_space<vmem>>, vector<1x1x2x256xf32>
    %138 = vector.shape_cast %137 : vector<1x1x2x256xf32> to vector<2x256xf32>
    %139 = arith.mulf %138, %136 : vector<2x256xf32>
    %140 = arith.addf %135, %139 : vector<2x256xf32>
    %c1_58 = arith.constant 1 : index
    %c4_59 = arith.constant 4 : index
    %c0_60 = arith.constant 0 : index
    %c0_61 = arith.constant 0 : index
    %141 = vector.load %arg4[%c1_58, %c4_59, %c0_60, %c0_61] : memref<4x9x2x256xf32, #tpu.memory_space<vmem>>, vector<1x1x2x256xf32>
    %142 = vector.shape_cast %141 : vector<1x1x2x256xf32> to vector<2x256xf32>
    %143 = arith.mulf %142, %118 : vector<2x256xf32>
    %144 = arith.addf %140, %143 : vector<2x256xf32>
    %145 = vector.extract_strided_slice %119 {offsets = [0, 129], sizes = [2, 256], strides = [1, 1]} : vector<2x512xf32> to vector<2x256xf32>
    %c1_62 = arith.constant 1 : index
    %c5_63 = arith.constant 5 : index
    %c0_64 = arith.constant 0 : index
    %c0_65 = arith.constant 0 : index
    %146 = vector.load %arg4[%c1_62, %c5_63, %c0_64, %c0_65] : memref<4x9x2x256xf32, #tpu.memory_space<vmem>>, vector<1x1x2x256xf32>
    %147 = vector.shape_cast %146 : vector<1x1x2x256xf32> to vector<2x256xf32>
    %148 = arith.mulf %147, %145 : vector<2x256xf32>
    %149 = arith.addf %144, %148 : vector<2x256xf32>
    %150 = vector.extract_strided_slice %119 {offsets = [0, 143], sizes = [2, 256], strides = [1, 1]} : vector<2x512xf32> to vector<2x256xf32>
    %c1_66 = arith.constant 1 : index
    %c6_67 = arith.constant 6 : index
    %c0_68 = arith.constant 0 : index
    %c0_69 = arith.constant 0 : index
    %151 = vector.load %arg4[%c1_66, %c6_67, %c0_68, %c0_69] : memref<4x9x2x256xf32, #tpu.memory_space<vmem>>, vector<1x1x2x256xf32>
    %152 = vector.shape_cast %151 : vector<1x1x2x256xf32> to vector<2x256xf32>
    %153 = arith.mulf %152, %150 : vector<2x256xf32>
    %154 = arith.addf %149, %153 : vector<2x256xf32>
    %155 = vector.extract_strided_slice %119 {offsets = [0, 144], sizes = [2, 256], strides = [1, 1]} : vector<2x512xf32> to vector<2x256xf32>
    %c1_70 = arith.constant 1 : index
    %c7_71 = arith.constant 7 : index
    %c0_72 = arith.constant 0 : index
    %c0_73 = arith.constant 0 : index
    %156 = vector.load %arg4[%c1_70, %c7_71, %c0_72, %c0_73] : memref<4x9x2x256xf32, #tpu.memory_space<vmem>>, vector<1x1x2x256xf32>
    %157 = vector.shape_cast %156 : vector<1x1x2x256xf32> to vector<2x256xf32>
    %158 = arith.mulf %157, %155 : vector<2x256xf32>
    %159 = arith.addf %154, %158 : vector<2x256xf32>
    %160 = vector.extract_strided_slice %119 {offsets = [0, 145], sizes = [2, 256], strides = [1, 1]} : vector<2x512xf32> to vector<2x256xf32>
    %c1_74 = arith.constant 1 : index
    %c8_75 = arith.constant 8 : index
    %c0_76 = arith.constant 0 : index
    %c0_77 = arith.constant 0 : index
    %161 = vector.load %arg4[%c1_74, %c8_75, %c0_76, %c0_77] : memref<4x9x2x256xf32, #tpu.memory_space<vmem>>, vector<1x1x2x256xf32>
    %162 = vector.shape_cast %161 : vector<1x1x2x256xf32> to vector<2x256xf32>
    %163 = arith.mulf %162, %160 : vector<2x256xf32>
    %164 = arith.addf %159, %163 : vector<2x256xf32>
    %c1_78 = arith.constant 1 : index
    %c0_79 = arith.constant 0 : index
    %c0_80 = arith.constant 0 : index
    %165 = vector.load %arg5[%c1_78, %c0_79, %c0_80] : memref<4x2x1xf32, #tpu.memory_space<vmem>>, vector<1x2x1xf32>
    %166 = vector.shape_cast %165 : vector<1x2x1xf32> to vector<2x1xf32>
    %167 = vector.broadcast %166 : vector<2x1xf32> to vector<2x256xf32>
    %168 = arith.addf %164, %167 : vector<2x256xf32>
    %cst_81 = arith.constant 0.000000e+00 : f32
    %169 = vector.broadcast %cst_81 : f32 to vector<2x256xf32>
    %170 = arith.maximumf %168, %169 : vector<2x256xf32>
    %171 = vector.extract_strided_slice %62 {offsets = [4, 0], sizes = [2, 256], strides = [1, 1]} : vector<8x256xf32> to vector<2x256xf32>
    %172 = arith.addf %171, %170 : vector<2x256xf32>
    %173 = tpu.concatenate %63, %172, %63 in 1 : vector<2x128xf32>, vector<2x256xf32>, vector<2x128xf32> -> vector<2x512xf32>
    %cst_82 = arith.constant 0.000000e+00 : f32
    %174 = vector.broadcast %cst_82 : f32 to vector<2x256xf32>
    %175 = vector.extract_strided_slice %173 {offsets = [0, 111], sizes = [2, 256], strides = [1, 1]} : vector<2x512xf32> to vector<2x256xf32>
    %c2_83 = arith.constant 2 : index
    %c0_84 = arith.constant 0 : index
    %c0_85 = arith.constant 0 : index
    %c0_86 = arith.constant 0 : index
    %176 = vector.load %arg4[%c2_83, %c0_84, %c0_85, %c0_86] : memref<4x9x2x256xf32, #tpu.memory_space<vmem>>, vector<1x1x2x256xf32>
    %177 = vector.shape_cast %176 : vector<1x1x2x256xf32> to vector<2x256xf32>
    %178 = arith.mulf %177, %175 : vector<2x256xf32>
    %179 = arith.addf %174, %178 : vector<2x256xf32>
    %180 = vector.extract_strided_slice %173 {offsets = [0, 112], sizes = [2, 256], strides = [1, 1]} : vector<2x512xf32> to vector<2x256xf32>
    %c2_87 = arith.constant 2 : index
    %c1_88 = arith.constant 1 : index
    %c0_89 = arith.constant 0 : index
    %c0_90 = arith.constant 0 : index
    %181 = vector.load %arg4[%c2_87, %c1_88, %c0_89, %c0_90] : memref<4x9x2x256xf32, #tpu.memory_space<vmem>>, vector<1x1x2x256xf32>
    %182 = vector.shape_cast %181 : vector<1x1x2x256xf32> to vector<2x256xf32>
    %183 = arith.mulf %182, %180 : vector<2x256xf32>
    %184 = arith.addf %179, %183 : vector<2x256xf32>
    %185 = vector.extract_strided_slice %173 {offsets = [0, 113], sizes = [2, 256], strides = [1, 1]} : vector<2x512xf32> to vector<2x256xf32>
    %c2_91 = arith.constant 2 : index
    %c2_92 = arith.constant 2 : index
    %c0_93 = arith.constant 0 : index
    %c0_94 = arith.constant 0 : index
    %186 = vector.load %arg4[%c2_91, %c2_92, %c0_93, %c0_94] : memref<4x9x2x256xf32, #tpu.memory_space<vmem>>, vector<1x1x2x256xf32>
    %187 = vector.shape_cast %186 : vector<1x1x2x256xf32> to vector<2x256xf32>
    %188 = arith.mulf %187, %185 : vector<2x256xf32>
    %189 = arith.addf %184, %188 : vector<2x256xf32>
    %190 = vector.extract_strided_slice %173 {offsets = [0, 127], sizes = [2, 256], strides = [1, 1]} : vector<2x512xf32> to vector<2x256xf32>
    %c2_95 = arith.constant 2 : index
    %c3_96 = arith.constant 3 : index
    %c0_97 = arith.constant 0 : index
    %c0_98 = arith.constant 0 : index
    %191 = vector.load %arg4[%c2_95, %c3_96, %c0_97, %c0_98] : memref<4x9x2x256xf32, #tpu.memory_space<vmem>>, vector<1x1x2x256xf32>
    %192 = vector.shape_cast %191 : vector<1x1x2x256xf32> to vector<2x256xf32>
    %193 = arith.mulf %192, %190 : vector<2x256xf32>
    %194 = arith.addf %189, %193 : vector<2x256xf32>
    %c2_99 = arith.constant 2 : index
    %c4_100 = arith.constant 4 : index
    %c0_101 = arith.constant 0 : index
    %c0_102 = arith.constant 0 : index
    %195 = vector.load %arg4[%c2_99, %c4_100, %c0_101, %c0_102] : memref<4x9x2x256xf32, #tpu.memory_space<vmem>>, vector<1x1x2x256xf32>
    %196 = vector.shape_cast %195 : vector<1x1x2x256xf32> to vector<2x256xf32>
    %197 = arith.mulf %196, %172 : vector<2x256xf32>
    %198 = arith.addf %194, %197 : vector<2x256xf32>
    %199 = vector.extract_strided_slice %173 {offsets = [0, 129], sizes = [2, 256], strides = [1, 1]} : vector<2x512xf32> to vector<2x256xf32>
    %c2_103 = arith.constant 2 : index
    %c5_104 = arith.constant 5 : index
    %c0_105 = arith.constant 0 : index
    %c0_106 = arith.constant 0 : index
    %200 = vector.load %arg4[%c2_103, %c5_104, %c0_105, %c0_106] : memref<4x9x2x256xf32, #tpu.memory_space<vmem>>, vector<1x1x2x256xf32>
    %201 = vector.shape_cast %200 : vector<1x1x2x256xf32> to vector<2x256xf32>
    %202 = arith.mulf %201, %199 : vector<2x256xf32>
    %203 = arith.addf %198, %202 : vector<2x256xf32>
    %204 = vector.extract_strided_slice %173 {offsets = [0, 143], sizes = [2, 256], strides = [1, 1]} : vector<2x512xf32> to vector<2x256xf32>
    %c2_107 = arith.constant 2 : index
    %c6_108 = arith.constant 6 : index
    %c0_109 = arith.constant 0 : index
    %c0_110 = arith.constant 0 : index
    %205 = vector.load %arg4[%c2_107, %c6_108, %c0_109, %c0_110] : memref<4x9x2x256xf32, #tpu.memory_space<vmem>>, vector<1x1x2x256xf32>
    %206 = vector.shape_cast %205 : vector<1x1x2x256xf32> to vector<2x256xf32>
    %207 = arith.mulf %206, %204 : vector<2x256xf32>
    %208 = arith.addf %203, %207 : vector<2x256xf32>
    %209 = vector.extract_strided_slice %173 {offsets = [0, 144], sizes = [2, 256], strides = [1, 1]} : vector<2x512xf32> to vector<2x256xf32>
    %c2_111 = arith.constant 2 : index
    %c7_112 = arith.constant 7 : index
    %c0_113 = arith.constant 0 : index
    %c0_114 = arith.constant 0 : index
    %210 = vector.load %arg4[%c2_111, %c7_112, %c0_113, %c0_114] : memref<4x9x2x256xf32, #tpu.memory_space<vmem>>, vector<1x1x2x256xf32>
    %211 = vector.shape_cast %210 : vector<1x1x2x256xf32> to vector<2x256xf32>
    %212 = arith.mulf %211, %209 : vector<2x256xf32>
    %213 = arith.addf %208, %212 : vector<2x256xf32>
    %214 = vector.extract_strided_slice %173 {offsets = [0, 145], sizes = [2, 256], strides = [1, 1]} : vector<2x512xf32> to vector<2x256xf32>
    %c2_115 = arith.constant 2 : index
    %c8_116 = arith.constant 8 : index
    %c0_117 = arith.constant 0 : index
    %c0_118 = arith.constant 0 : index
    %215 = vector.load %arg4[%c2_115, %c8_116, %c0_117, %c0_118] : memref<4x9x2x256xf32, #tpu.memory_space<vmem>>, vector<1x1x2x256xf32>
    %216 = vector.shape_cast %215 : vector<1x1x2x256xf32> to vector<2x256xf32>
    %217 = arith.mulf %216, %214 : vector<2x256xf32>
    %218 = arith.addf %213, %217 : vector<2x256xf32>
    %c2_119 = arith.constant 2 : index
    %c0_120 = arith.constant 0 : index
    %c0_121 = arith.constant 0 : index
    %219 = vector.load %arg5[%c2_119, %c0_120, %c0_121] : memref<4x2x1xf32, #tpu.memory_space<vmem>>, vector<1x2x1xf32>
    %220 = vector.shape_cast %219 : vector<1x2x1xf32> to vector<2x1xf32>
    %221 = vector.broadcast %220 : vector<2x1xf32> to vector<2x256xf32>
    %222 = arith.addf %218, %221 : vector<2x256xf32>
    %cst_122 = arith.constant 0.000000e+00 : f32
    %223 = vector.broadcast %cst_122 : f32 to vector<2x256xf32>
    %224 = arith.maximumf %222, %223 : vector<2x256xf32>
    %225 = vector.extract_strided_slice %62 {offsets = [6, 0], sizes = [2, 256], strides = [1, 1]} : vector<8x256xf32> to vector<2x256xf32>
    %226 = arith.addf %225, %224 : vector<2x256xf32>
    %227 = tpu.concatenate %63, %226, %63 in 1 : vector<2x128xf32>, vector<2x256xf32>, vector<2x128xf32> -> vector<2x512xf32>
    %cst_123 = arith.constant 0.000000e+00 : f32
    %228 = vector.broadcast %cst_123 : f32 to vector<2x256xf32>
    %229 = vector.extract_strided_slice %227 {offsets = [0, 111], sizes = [2, 256], strides = [1, 1]} : vector<2x512xf32> to vector<2x256xf32>
    %c3_124 = arith.constant 3 : index
    %c0_125 = arith.constant 0 : index
    %c0_126 = arith.constant 0 : index
    %c0_127 = arith.constant 0 : index
    %230 = vector.load %arg4[%c3_124, %c0_125, %c0_126, %c0_127] : memref<4x9x2x256xf32, #tpu.memory_space<vmem>>, vector<1x1x2x256xf32>
    %231 = vector.shape_cast %230 : vector<1x1x2x256xf32> to vector<2x256xf32>
    %232 = arith.mulf %231, %229 : vector<2x256xf32>
    %233 = arith.addf %228, %232 : vector<2x256xf32>
    %234 = vector.extract_strided_slice %227 {offsets = [0, 112], sizes = [2, 256], strides = [1, 1]} : vector<2x512xf32> to vector<2x256xf32>
    %c3_128 = arith.constant 3 : index
    %c1_129 = arith.constant 1 : index
    %c0_130 = arith.constant 0 : index
    %c0_131 = arith.constant 0 : index
    %235 = vector.load %arg4[%c3_128, %c1_129, %c0_130, %c0_131] : memref<4x9x2x256xf32, #tpu.memory_space<vmem>>, vector<1x1x2x256xf32>
    %236 = vector.shape_cast %235 : vector<1x1x2x256xf32> to vector<2x256xf32>
    %237 = arith.mulf %236, %234 : vector<2x256xf32>
    %238 = arith.addf %233, %237 : vector<2x256xf32>
    %239 = vector.extract_strided_slice %227 {offsets = [0, 113], sizes = [2, 256], strides = [1, 1]} : vector<2x512xf32> to vector<2x256xf32>
    %c3_132 = arith.constant 3 : index
    %c2_133 = arith.constant 2 : index
    %c0_134 = arith.constant 0 : index
    %c0_135 = arith.constant 0 : index
    %240 = vector.load %arg4[%c3_132, %c2_133, %c0_134, %c0_135] : memref<4x9x2x256xf32, #tpu.memory_space<vmem>>, vector<1x1x2x256xf32>
    %241 = vector.shape_cast %240 : vector<1x1x2x256xf32> to vector<2x256xf32>
    %242 = arith.mulf %241, %239 : vector<2x256xf32>
    %243 = arith.addf %238, %242 : vector<2x256xf32>
    %244 = vector.extract_strided_slice %227 {offsets = [0, 127], sizes = [2, 256], strides = [1, 1]} : vector<2x512xf32> to vector<2x256xf32>
    %c3_136 = arith.constant 3 : index
    %c3_137 = arith.constant 3 : index
    %c0_138 = arith.constant 0 : index
    %c0_139 = arith.constant 0 : index
    %245 = vector.load %arg4[%c3_136, %c3_137, %c0_138, %c0_139] : memref<4x9x2x256xf32, #tpu.memory_space<vmem>>, vector<1x1x2x256xf32>
    %246 = vector.shape_cast %245 : vector<1x1x2x256xf32> to vector<2x256xf32>
    %247 = arith.mulf %246, %244 : vector<2x256xf32>
    %248 = arith.addf %243, %247 : vector<2x256xf32>
    %c3_140 = arith.constant 3 : index
    %c4_141 = arith.constant 4 : index
    %c0_142 = arith.constant 0 : index
    %c0_143 = arith.constant 0 : index
    %249 = vector.load %arg4[%c3_140, %c4_141, %c0_142, %c0_143] : memref<4x9x2x256xf32, #tpu.memory_space<vmem>>, vector<1x1x2x256xf32>
    %250 = vector.shape_cast %249 : vector<1x1x2x256xf32> to vector<2x256xf32>
    %251 = arith.mulf %250, %226 : vector<2x256xf32>
    %252 = arith.addf %248, %251 : vector<2x256xf32>
    %253 = vector.extract_strided_slice %227 {offsets = [0, 129], sizes = [2, 256], strides = [1, 1]} : vector<2x512xf32> to vector<2x256xf32>
    %c3_144 = arith.constant 3 : index
    %c5_145 = arith.constant 5 : index
    %c0_146 = arith.constant 0 : index
    %c0_147 = arith.constant 0 : index
    %254 = vector.load %arg4[%c3_144, %c5_145, %c0_146, %c0_147] : memref<4x9x2x256xf32, #tpu.memory_space<vmem>>, vector<1x1x2x256xf32>
    %255 = vector.shape_cast %254 : vector<1x1x2x256xf32> to vector<2x256xf32>
    %256 = arith.mulf %255, %253 : vector<2x256xf32>
    %257 = arith.addf %252, %256 : vector<2x256xf32>
    %258 = vector.extract_strided_slice %227 {offsets = [0, 143], sizes = [2, 256], strides = [1, 1]} : vector<2x512xf32> to vector<2x256xf32>
    %c3_148 = arith.constant 3 : index
    %c6_149 = arith.constant 6 : index
    %c0_150 = arith.constant 0 : index
    %c0_151 = arith.constant 0 : index
    %259 = vector.load %arg4[%c3_148, %c6_149, %c0_150, %c0_151] : memref<4x9x2x256xf32, #tpu.memory_space<vmem>>, vector<1x1x2x256xf32>
    %260 = vector.shape_cast %259 : vector<1x1x2x256xf32> to vector<2x256xf32>
    %261 = arith.mulf %260, %258 : vector<2x256xf32>
    %262 = arith.addf %257, %261 : vector<2x256xf32>
    %263 = vector.extract_strided_slice %227 {offsets = [0, 144], sizes = [2, 256], strides = [1, 1]} : vector<2x512xf32> to vector<2x256xf32>
    %c3_152 = arith.constant 3 : index
    %c7_153 = arith.constant 7 : index
    %c0_154 = arith.constant 0 : index
    %c0_155 = arith.constant 0 : index
    %264 = vector.load %arg4[%c3_152, %c7_153, %c0_154, %c0_155] : memref<4x9x2x256xf32, #tpu.memory_space<vmem>>, vector<1x1x2x256xf32>
    %265 = vector.shape_cast %264 : vector<1x1x2x256xf32> to vector<2x256xf32>
    %266 = arith.mulf %265, %263 : vector<2x256xf32>
    %267 = arith.addf %262, %266 : vector<2x256xf32>
    %268 = vector.extract_strided_slice %227 {offsets = [0, 145], sizes = [2, 256], strides = [1, 1]} : vector<2x512xf32> to vector<2x256xf32>
    %c3_156 = arith.constant 3 : index
    %c8_157 = arith.constant 8 : index
    %c0_158 = arith.constant 0 : index
    %c0_159 = arith.constant 0 : index
    %269 = vector.load %arg4[%c3_156, %c8_157, %c0_158, %c0_159] : memref<4x9x2x256xf32, #tpu.memory_space<vmem>>, vector<1x1x2x256xf32>
    %270 = vector.shape_cast %269 : vector<1x1x2x256xf32> to vector<2x256xf32>
    %271 = arith.mulf %270, %268 : vector<2x256xf32>
    %272 = arith.addf %267, %271 : vector<2x256xf32>
    %c3_160 = arith.constant 3 : index
    %c0_161 = arith.constant 0 : index
    %c0_162 = arith.constant 0 : index
    %273 = vector.load %arg5[%c3_160, %c0_161, %c0_162] : memref<4x2x1xf32, #tpu.memory_space<vmem>>, vector<1x2x1xf32>
    %274 = vector.shape_cast %273 : vector<1x2x1xf32> to vector<2x1xf32>
    %275 = vector.broadcast %274 : vector<2x1xf32> to vector<2x256xf32>
    %276 = arith.addf %272, %275 : vector<2x256xf32>
    %cst_163 = arith.constant 0.000000e+00 : f32
    %277 = vector.broadcast %cst_163 : f32 to vector<2x256xf32>
    %278 = arith.maximumf %276, %277 : vector<2x256xf32>
    %c0_164 = arith.constant 0 : index
    %c0_165 = arith.constant 0 : index
    %c0_166 = arith.constant 0 : index
    %279 = vector.load %arg6[%c0_164, %c0_165, %c0_166] : memref<8x8x1xf32, #tpu.memory_space<vmem>>, vector<8x8x1xf32>
    %280 = vector.extract_strided_slice %279 {offsets = [0, 0, 0], sizes = [1, 8, 1], strides = [1, 1, 1]} : vector<8x8x1xf32> to vector<1x8x1xf32>
    %281 = vector.shape_cast %280 : vector<1x8x1xf32> to vector<8x1xf32>
    %282 = vector.extract_strided_slice %116 {offsets = [0, 0], sizes = [1, 256], strides = [1, 1]} : vector<2x256xf32> to vector<1x256xf32>
    %283 = vector.broadcast %281 : vector<8x1xf32> to vector<8x256xf32>
    %284 = vector.broadcast %282 : vector<1x256xf32> to vector<8x256xf32>
    %285 = arith.mulf %283, %284 : vector<8x256xf32>
    %286 = vector.extract_strided_slice %279 {offsets = [1, 0, 0], sizes = [1, 8, 1], strides = [1, 1, 1]} : vector<8x8x1xf32> to vector<1x8x1xf32>
    %287 = vector.shape_cast %286 : vector<1x8x1xf32> to vector<8x1xf32>
    %288 = vector.extract_strided_slice %116 {offsets = [1, 0], sizes = [1, 256], strides = [1, 1]} : vector<2x256xf32> to vector<1x256xf32>
    %289 = vector.broadcast %287 : vector<8x1xf32> to vector<8x256xf32>
    %290 = vector.broadcast %288 : vector<1x256xf32> to vector<8x256xf32>
    %291 = arith.mulf %289, %290 : vector<8x256xf32>
    %292 = arith.addf %285, %291 : vector<8x256xf32>
    %293 = vector.extract_strided_slice %279 {offsets = [2, 0, 0], sizes = [1, 8, 1], strides = [1, 1, 1]} : vector<8x8x1xf32> to vector<1x8x1xf32>
    %294 = vector.shape_cast %293 : vector<1x8x1xf32> to vector<8x1xf32>
    %295 = vector.extract_strided_slice %170 {offsets = [0, 0], sizes = [1, 256], strides = [1, 1]} : vector<2x256xf32> to vector<1x256xf32>
    %296 = vector.broadcast %294 : vector<8x1xf32> to vector<8x256xf32>
    %297 = vector.broadcast %295 : vector<1x256xf32> to vector<8x256xf32>
    %298 = arith.mulf %296, %297 : vector<8x256xf32>
    %299 = arith.addf %292, %298 : vector<8x256xf32>
    %300 = vector.extract_strided_slice %279 {offsets = [3, 0, 0], sizes = [1, 8, 1], strides = [1, 1, 1]} : vector<8x8x1xf32> to vector<1x8x1xf32>
    %301 = vector.shape_cast %300 : vector<1x8x1xf32> to vector<8x1xf32>
    %302 = vector.extract_strided_slice %170 {offsets = [1, 0], sizes = [1, 256], strides = [1, 1]} : vector<2x256xf32> to vector<1x256xf32>
    %303 = vector.broadcast %301 : vector<8x1xf32> to vector<8x256xf32>
    %304 = vector.broadcast %302 : vector<1x256xf32> to vector<8x256xf32>
    %305 = arith.mulf %303, %304 : vector<8x256xf32>
    %306 = arith.addf %299, %305 : vector<8x256xf32>
    %307 = vector.extract_strided_slice %279 {offsets = [4, 0, 0], sizes = [1, 8, 1], strides = [1, 1, 1]} : vector<8x8x1xf32> to vector<1x8x1xf32>
    %308 = vector.shape_cast %307 : vector<1x8x1xf32> to vector<8x1xf32>
    %309 = vector.extract_strided_slice %224 {offsets = [0, 0], sizes = [1, 256], strides = [1, 1]} : vector<2x256xf32> to vector<1x256xf32>
    %310 = vector.broadcast %308 : vector<8x1xf32> to vector<8x256xf32>
    %311 = vector.broadcast %309 : vector<1x256xf32> to vector<8x256xf32>
    %312 = arith.mulf %310, %311 : vector<8x256xf32>
    %313 = arith.addf %306, %312 : vector<8x256xf32>
    %314 = vector.extract_strided_slice %279 {offsets = [5, 0, 0], sizes = [1, 8, 1], strides = [1, 1, 1]} : vector<8x8x1xf32> to vector<1x8x1xf32>
    %315 = vector.shape_cast %314 : vector<1x8x1xf32> to vector<8x1xf32>
    %316 = vector.extract_strided_slice %224 {offsets = [1, 0], sizes = [1, 256], strides = [1, 1]} : vector<2x256xf32> to vector<1x256xf32>
    %317 = vector.broadcast %315 : vector<8x1xf32> to vector<8x256xf32>
    %318 = vector.broadcast %316 : vector<1x256xf32> to vector<8x256xf32>
    %319 = arith.mulf %317, %318 : vector<8x256xf32>
    %320 = arith.addf %313, %319 : vector<8x256xf32>
    %321 = vector.extract_strided_slice %279 {offsets = [6, 0, 0], sizes = [1, 8, 1], strides = [1, 1, 1]} : vector<8x8x1xf32> to vector<1x8x1xf32>
    %322 = vector.shape_cast %321 : vector<1x8x1xf32> to vector<8x1xf32>
    %323 = vector.extract_strided_slice %278 {offsets = [0, 0], sizes = [1, 256], strides = [1, 1]} : vector<2x256xf32> to vector<1x256xf32>
    %324 = vector.broadcast %322 : vector<8x1xf32> to vector<8x256xf32>
    %325 = vector.broadcast %323 : vector<1x256xf32> to vector<8x256xf32>
    %326 = arith.mulf %324, %325 : vector<8x256xf32>
    %327 = arith.addf %320, %326 : vector<8x256xf32>
    %328 = vector.extract_strided_slice %279 {offsets = [7, 0, 0], sizes = [1, 8, 1], strides = [1, 1, 1]} : vector<8x8x1xf32> to vector<1x8x1xf32>
    %329 = vector.shape_cast %328 : vector<1x8x1xf32> to vector<8x1xf32>
    %330 = vector.extract_strided_slice %278 {offsets = [1, 0], sizes = [1, 256], strides = [1, 1]} : vector<2x256xf32> to vector<1x256xf32>
    %331 = vector.broadcast %329 : vector<8x1xf32> to vector<8x256xf32>
    %332 = vector.broadcast %330 : vector<1x256xf32> to vector<8x256xf32>
    %333 = arith.mulf %331, %332 : vector<8x256xf32>
    %334 = arith.addf %327, %333 : vector<8x256xf32>
    %c0_167 = arith.constant 0 : index
    %c0_168 = arith.constant 0 : index
    %335 = vector.load %arg7[%c0_167, %c0_168] : memref<8x1xf32, #tpu.memory_space<vmem>>, vector<8x1xf32>
    %336 = vector.broadcast %335 : vector<8x1xf32> to vector<8x256xf32>
    %337 = arith.addf %334, %336 : vector<8x256xf32>
    %cst_169 = arith.constant dense<0.000000e+00> : vector<8xf32>
    %338 = vector.multi_reduction <add>, %337, %cst_169 [1] : vector<8x256xf32> to vector<8xf32>
    %339 = vector.shape_cast %338 : vector<8xf32> to vector<8x1xf32>
    %cst_170 = arith.constant 2.560000e+02 : f32
    %340 = vector.broadcast %cst_170 : f32 to vector<8x1xf32>
    %341 = arith.divf %339, %340 : vector<8x1xf32>
    %c0_171 = arith.constant 0 : index
    %c0_172 = arith.constant 0 : index
    %c0_173 = arith.constant 0 : index
    %342 = vector.load %arg8[%c0_171, %c0_172, %c0_173] : memref<8x8x1xf32, #tpu.memory_space<vmem>>, vector<8x8x1xf32>
    %343 = vector.extract_strided_slice %342 {offsets = [0, 0, 0], sizes = [1, 8, 1], strides = [1, 1, 1]} : vector<8x8x1xf32> to vector<1x8x1xf32>
    %344 = vector.shape_cast %343 : vector<1x8x1xf32> to vector<8x1xf32>
    %345 = vector.extract_strided_slice %341 {offsets = [0, 0], sizes = [1, 1], strides = [1, 1]} : vector<8x1xf32> to vector<1x1xf32>
    %346 = vector.broadcast %345 : vector<1x1xf32> to vector<8x1xf32>
    %347 = arith.mulf %344, %346 : vector<8x1xf32>
    %348 = vector.extract_strided_slice %342 {offsets = [1, 0, 0], sizes = [1, 8, 1], strides = [1, 1, 1]} : vector<8x8x1xf32> to vector<1x8x1xf32>
    %349 = vector.shape_cast %348 : vector<1x8x1xf32> to vector<8x1xf32>
    %350 = vector.extract_strided_slice %341 {offsets = [1, 0], sizes = [1, 1], strides = [1, 1]} : vector<8x1xf32> to vector<1x1xf32>
    %351 = vector.broadcast %350 : vector<1x1xf32> to vector<8x1xf32>
    %352 = arith.mulf %349, %351 : vector<8x1xf32>
    %353 = arith.addf %347, %352 : vector<8x1xf32>
    %354 = vector.extract_strided_slice %342 {offsets = [2, 0, 0], sizes = [1, 8, 1], strides = [1, 1, 1]} : vector<8x8x1xf32> to vector<1x8x1xf32>
    %355 = vector.shape_cast %354 : vector<1x8x1xf32> to vector<8x1xf32>
    %356 = vector.extract_strided_slice %341 {offsets = [2, 0], sizes = [1, 1], strides = [1, 1]} : vector<8x1xf32> to vector<1x1xf32>
    %357 = vector.broadcast %356 : vector<1x1xf32> to vector<8x1xf32>
    %358 = arith.mulf %355, %357 : vector<8x1xf32>
    %359 = arith.addf %353, %358 : vector<8x1xf32>
    %360 = vector.extract_strided_slice %342 {offsets = [3, 0, 0], sizes = [1, 8, 1], strides = [1, 1, 1]} : vector<8x8x1xf32> to vector<1x8x1xf32>
    %361 = vector.shape_cast %360 : vector<1x8x1xf32> to vector<8x1xf32>
    %362 = vector.extract_strided_slice %341 {offsets = [3, 0], sizes = [1, 1], strides = [1, 1]} : vector<8x1xf32> to vector<1x1xf32>
    %363 = vector.broadcast %362 : vector<1x1xf32> to vector<8x1xf32>
    %364 = arith.mulf %361, %363 : vector<8x1xf32>
    %365 = arith.addf %359, %364 : vector<8x1xf32>
    %366 = vector.extract_strided_slice %342 {offsets = [4, 0, 0], sizes = [1, 8, 1], strides = [1, 1, 1]} : vector<8x8x1xf32> to vector<1x8x1xf32>
    %367 = vector.shape_cast %366 : vector<1x8x1xf32> to vector<8x1xf32>
    %368 = vector.extract_strided_slice %341 {offsets = [4, 0], sizes = [1, 1], strides = [1, 1]} : vector<8x1xf32> to vector<1x1xf32>
    %369 = vector.broadcast %368 : vector<1x1xf32> to vector<8x1xf32>
    %370 = arith.mulf %367, %369 : vector<8x1xf32>
    %371 = arith.addf %365, %370 : vector<8x1xf32>
    %372 = vector.extract_strided_slice %342 {offsets = [5, 0, 0], sizes = [1, 8, 1], strides = [1, 1, 1]} : vector<8x8x1xf32> to vector<1x8x1xf32>
    %373 = vector.shape_cast %372 : vector<1x8x1xf32> to vector<8x1xf32>
    %374 = vector.extract_strided_slice %341 {offsets = [5, 0], sizes = [1, 1], strides = [1, 1]} : vector<8x1xf32> to vector<1x1xf32>
    %375 = vector.broadcast %374 : vector<1x1xf32> to vector<8x1xf32>
    %376 = arith.mulf %373, %375 : vector<8x1xf32>
    %377 = arith.addf %371, %376 : vector<8x1xf32>
    %378 = vector.extract_strided_slice %342 {offsets = [6, 0, 0], sizes = [1, 8, 1], strides = [1, 1, 1]} : vector<8x8x1xf32> to vector<1x8x1xf32>
    %379 = vector.shape_cast %378 : vector<1x8x1xf32> to vector<8x1xf32>
    %380 = vector.extract_strided_slice %341 {offsets = [6, 0], sizes = [1, 1], strides = [1, 1]} : vector<8x1xf32> to vector<1x1xf32>
    %381 = vector.broadcast %380 : vector<1x1xf32> to vector<8x1xf32>
    %382 = arith.mulf %379, %381 : vector<8x1xf32>
    %383 = arith.addf %377, %382 : vector<8x1xf32>
    %384 = vector.extract_strided_slice %342 {offsets = [7, 0, 0], sizes = [1, 8, 1], strides = [1, 1, 1]} : vector<8x8x1xf32> to vector<1x8x1xf32>
    %385 = vector.shape_cast %384 : vector<1x8x1xf32> to vector<8x1xf32>
    %386 = vector.extract_strided_slice %341 {offsets = [7, 0], sizes = [1, 1], strides = [1, 1]} : vector<8x1xf32> to vector<1x1xf32>
    %387 = vector.broadcast %386 : vector<1x1xf32> to vector<8x1xf32>
    %388 = arith.mulf %385, %387 : vector<8x1xf32>
    %389 = arith.addf %383, %388 : vector<8x1xf32>
    %390 = arith.negf %389 : vector<8x1xf32>
    %391 = math.exp %390 : vector<8x1xf32>
    %cst_174 = arith.constant 1.000000e+00 : f32
    %392 = vector.broadcast %cst_174 : f32 to vector<8x1xf32>
    %393 = arith.addf %392, %391 : vector<8x1xf32>
    %394 = arith.divf %392, %393 : vector<8x1xf32>
    %395 = vector.broadcast %394 : vector<8x1xf32> to vector<8x256xf32>
    %396 = arith.mulf %337, %395 : vector<8x256xf32>
    %397 = arith.addf %396, %1 : vector<8x256xf32>
    %cst_175 = arith.constant 0.000000e+00 : f32
    %398 = vector.broadcast %cst_175 : f32 to vector<8x256xf32>
    %399 = arith.maximumf %397, %398 : vector<8x256xf32>
    %c0_176 = arith.constant 0 : index
    %c0_177 = arith.constant 0 : index
    %c0_178 = arith.constant 0 : index
    %400 = vector.load %arg9[%c0_176, %c0_177, %c0_178] : memref<1x8x256xf32, #tpu.memory_space<vmem>>, vector<1x8x256xf32>
    %401 = vector.shape_cast %400 : vector<1x8x256xf32> to vector<8x256xf32>
    %402 = vector.shape_cast %399 : vector<8x256xf32> to vector<1x8x256xf32>
    tpu.vector_store %arg9[%c0_176, %c0_177, %c0_178], %402 {strides = array<i32>} : memref<1x8x256xf32, #tpu.memory_space<vmem>>, vector<1x8x256xf32>,
    return
  }
  func.func @transform_0(%arg0: i32) -> (i32, i32, i32) {
    %c0_i32 = arith.constant 0 : i32
    %c0_i32_0 = arith.constant 0 : i32
    %c0_i32_1 = arith.constant 0 : i32
    return %arg0, %c0_i32, %c0_i32_0 : i32, i32, i32
  }
  func.func @transform_1(%arg0: i32) -> (i32, i32, i32) {
    %c0_i32 = arith.constant 0 : i32
    %c0_i32_0 = arith.constant 0 : i32
    %c0_i32_1 = arith.constant 0 : i32
    %c0_i32_2 = arith.constant 0 : i32
    return %c0_i32, %c0_i32_0, %c0_i32_1 : i32, i32, i32
  }
  func.func @transform_2(%arg0: i32) -> (i32, i32) {
    %c0_i32 = arith.constant 0 : i32
    %c0_i32_0 = arith.constant 0 : i32
    %c0_i32_1 = arith.constant 0 : i32
    return %c0_i32, %c0_i32_0 : i32, i32
  }
  func.func @transform_3(%arg0: i32) -> (i32, i32, i32, i32) {
    %c0_i32 = arith.constant 0 : i32
    %c0_i32_0 = arith.constant 0 : i32
    %c0_i32_1 = arith.constant 0 : i32
    %c0_i32_2 = arith.constant 0 : i32
    %c0_i32_3 = arith.constant 0 : i32
    return %c0_i32, %c0_i32_0, %c0_i32_1, %c0_i32_2 : i32, i32, i32, i32
  }
  func.func @transform_4(%arg0: i32) -> (i32, i32, i32) {
    %c0_i32 = arith.constant 0 : i32
    %c0_i32_0 = arith.constant 0 : i32
    %c0_i32_1 = arith.constant 0 : i32
    %c0_i32_2 = arith.constant 0 : i32
    return %c0_i32, %c0_i32_0, %c0_i32_1 : i32, i32, i32
  }
  func.func @transform_5(%arg0: i32) -> (i32, i32, i32) {
    %c0_i32 = arith.constant 0 : i32
    %c0_i32_0 = arith.constant 0 : i32
    %c0_i32_1 = arith.constant 0 : i32
    %c0_i32_2 = arith.constant 0 : i32
    return %c0_i32, %c0_i32_0, %c0_i32_1 : i32, i32, i32
  }
  func.func @transform_6(%arg0: i32) -> (i32, i32) {
    %c0_i32 = arith.constant 0 : i32
    %c0_i32_0 = arith.constant 0 : i32
    %c0_i32_1 = arith.constant 0 : i32
    return %c0_i32, %c0_i32_0 : i32, i32
  }
  func.func @transform_7(%arg0: i32) -> (i32, i32, i32) {
    %c0_i32 = arith.constant 0 : i32
    %c0_i32_0 = arith.constant 0 : i32
    %c0_i32_1 = arith.constant 0 : i32
    %c0_i32_2 = arith.constant 0 : i32
    return %c0_i32, %c0_i32_0, %c0_i32_1 : i32, i32, i32
  }
  func.func @transform_8(%arg0: i32) -> (i32, i32, i32) {
    %c0_i32 = arith.constant 0 : i32
    %c0_i32_0 = arith.constant 0 : i32
    %c0_i32_1 = arith.constant 0 : i32
    return %arg0, %c0_i32, %c0_i32_0 : i32, i32, i32
  }
}

</mosaic_0001>

<llo_original>
// kernel: tpu_custom_call.1
$region0: #{tpu_custom_call.1}
  #allocation0 [shape = 'u32[]', space=smem, size = 0x4, offset = 0x4, fixed_abs, tag = 'smem constant byte address 0x4 - core index']
  #allocation1 [shape = 'u32[144,128]{1,0:T(1,128)}', space=vmem, size = 0x12000, scoped, tag = 'internal scratch']
  %s0 = inlined_call_operand.vmem [shape: f32[2,8,256], index: 0, kind: input, shape index: {}]
  %s1 = inlined_call_operand.vmem [shape: f32[8,8,1], index: 1, kind: input, shape index: {}]
  %s2 = inlined_call_operand.vmem [shape: f32[8,1], index: 2, kind: input, shape index: {}]
  %s3 = inlined_call_operand.vmem [shape: f32[4,9,2,256], index: 3, kind: input, shape index: {}]
  %s4 = inlined_call_operand.vmem [shape: f32[4,2,1], index: 4, kind: input, shape index: {}]
  %s5 = inlined_call_operand.vmem [shape: f32[8,8,1], index: 5, kind: input, shape index: {}]
  %s6 = inlined_call_operand.vmem [shape: f32[8,1], index: 6, kind: input, shape index: {}]
  %s7 = inlined_call_operand.vmem [shape: f32[8,8,1], index: 7, kind: input, shape index: {}]
  %s8 = inlined_call_operand.hbm [shape: f32[2,8,256], index: 8, kind: output, shape index: {}]
  %s9 = sld [smem:[#allocation0]]
  $region65: #{tpu_custom_call.1} parent=0
    _
  %s11 = ssub.s32 1, %s9
  %s12 = scalar_select 0, %s11, %s9
  $region1: #{tpu_custom_call.1} parent=0
    #allocation2 [shape = 'u8[16384]{0}', space=vmem, size = 0x4000, scoped, tag = 'output window, operand 0']
    #allocation3 [shape = 's32[2]{0}', space=sflag, size = 0x8, scoped, tag = 'scoped memory for tpu_custom_call.1']
    %13 = vsyncpa [#allocation3], 0
    %s14 = scalar_lea.sflag [#allocation3], 1
    %15 = vsyncpa %s14, 0
    loop: start=0, step=1, limit=4
    $region2: #{tpu_custom_call.1} parent=1 // loop_pre_header
      _
    $region3: #{tpu_custom_call.1} parent=1 // loop_header
      %s17 = sphi 0, %s21
      %p18 = scmp.ge.s32.totalorder %s17, 4
      %s27 = sphi 0, %s29
      %s30 = sphi 0, %s27
      %s31 = sphi 0, %s30
      %s47 = sphi 0, %s31
      %s51 = sphi 0, %s51
      %s53 = sphi 0, %s51
      %s54 = sphi 0, %s53
      %s68 = sphi 0, %s54
      %s72 = sphi 0, %s72
      %s74 = sphi 0, %s72
      %s75 = sphi 0, %s74
      %s89 = sphi 0, %s75
      %s93 = sphi 0, %s93
      %s95 = sphi 0, %s93
      %s96 = sphi 0, %s95
      %s110 = sphi 0, %s96
      %s114 = sphi 0, %s114
      %s116 = sphi 0, %s114
      %s117 = sphi 0, %s116
      %s131 = sphi 0, %s117
      %s135 = sphi 0, %s135
      %s137 = sphi 0, %s135
      %s138 = sphi 0, %s137
      %s152 = sphi 0, %s138
      %s156 = sphi 0, %s156
      %s158 = sphi 0, %s156
      %s159 = sphi 0, %s158
      %s173 = sphi 0, %s159
      %s177 = sphi 0, %s177
      %s179 = sphi 0, %s177
      %s180 = sphi 0, %s179
      %s194 = sphi 0, %s180
      %s200 = sphi 0, %s202
      %s203 = sphi 0, %s200
      %s204 = sphi 0, %s203
      %s220 = sphi 0, %s204
    $region4: #{tpu_custom_call.1} parent=1 // loop_header_branch
      %20 = sbr.rel (%p18) target = $region8
    $region5: #{tpu_custom_call.1} parent=1 // loop_body
      %s22 = ssub.s32 %s17, 1
      %s23 = ssub.s32 %s17, 2
      %s24 = sadd.s32 %s17, 1
      %s25 = ssub.s32 %s17, %s24
      %p26 = scmp.eq.s32.totalorder %s25, 0
      %s28 = sadd.s32 %s27, 1
      %s29 = scalar_select %p26, %s27, %s28
      %p32 = pneg %p26
      %p33 = scmp.eq.s32.totalorder %s17, 1
      %p34 = por %p32, %p33
      %p35 = scmp.ne.s32.totalorder %s27, %s30
      %p36 = scmp.eq.s32.totalorder %s17, 0
      %p37 = por %p35, %p36
      %p38 = scmp.ne.s32.totalorder %s27, %s30
      %p39 = scmp.eq.s32.totalorder %s22, 1
      %p40 = por %p38, %p39
      %p41 = scmp.ne.s32.totalorder %s30, %s31
      %p42 = scmp.eq.s32.totalorder %s22, 0
      %p43 = por %p41, %p42
      %p44 = scmp.ne.s32.totalorder %s30, %s31
      %p45 = scmp.eq.s32.totalorder %s23, 1
      %p46 = por %p44, %p45
      %p48 = scmp.ne.s32.totalorder %s31, %s47
      %p49 = scmp.eq.s32.totalorder %s23, 0
      %p50 = por %p48, %p49
      %s52 = sadd.s32 %s51, 1
      %p55 = scmp.eq.s32.totalorder %s17, 1
      %p56 = scmp.ne.s32.totalorder %s51, %s53
      %p57 = scmp.eq.s32.totalorder %s17, 0
      %p58 = por %p56, %p57
      %p59 = scmp.ne.s32.totalorder %s51, %s53
      %p60 = scmp.eq.s32.totalorder %s22, 1
      %p61 = por %p59, %p60
      %p62 = scmp.ne.s32.totalorder %s53, %s54
      %p63 = scmp.eq.s32.totalorder %s22, 0
      %p64 = por %p62, %p63
      %p65 = scmp.ne.s32.totalorder %s53, %s54
      %p66 = scmp.eq.s32.totalorder %s23, 1
      %p67 = por %p65, %p66
      %p69 = scmp.ne.s32.totalorder %s54, %s68
      %p70 = scmp.eq.s32.totalorder %s23, 0
      %p71 = por %p69, %p70
      %s73 = sadd.s32 %s72, 1
      %p76 = scmp.eq.s32.totalorder %s17, 1
      %p77 = scmp.ne.s32.totalorder %s72, %s74
      %p78 = scmp.eq.s32.totalorder %s17, 0
      %p79 = por %p77, %p78
      %p80 = scmp.ne.s32.totalorder %s72, %s74
      %p81 = scmp.eq.s32.totalorder %s22, 1
      %p82 = por %p80, %p81
      %p83 = scmp.ne.s32.totalorder %s74, %s75
      %p84 = scmp.eq.s32.totalorder %s22, 0
      %p85 = por %p83, %p84
      %p86 = scmp.ne.s32.totalorder %s74, %s75
      %p87 = scmp.eq.s32.totalorder %s23, 1
      %p88 = por %p86, %p87
      %p90 = scmp.ne.s32.totalorder %s75, %s89
      %p91 = scmp.eq.s32.totalorder %s23, 0
      %p92 = por %p90, %p91
      %s94 = sadd.s32 %s93, 1
      %p97 = scmp.eq.s32.totalorder %s17, 1
      %p98 = scmp.ne.s32.totalorder %s93, %s95
      %p99 = scmp.eq.s32.totalorder %s17, 0
      %p100 = por %p98, %p99
      %p101 = scmp.ne.s32.totalorder %s93, %s95
      %p102 = scmp.eq.s32.totalorder %s22, 1
      %p103 = por %p101, %p102
      %p104 = scmp.ne.s32.totalorder %s95, %s96
      %p105 = scmp.eq.s32.totalorder %s22, 0
      %p106 = por %p104, %p105
      %p107 = scmp.ne.s32.totalorder %s95, %s96
      %p108 = scmp.eq.s32.totalorder %s23, 1
      %p109 = por %p107, %p108
      %p111 = scmp.ne.s32.totalorder %s96, %s110
      %p112 = scmp.eq.s32.totalorder %s23, 0
      %p113 = por %p111, %p112
      %s115 = sadd.s32 %s114, 1
      %p118 = scmp.eq.s32.totalorder %s17, 1
      %p119 = scmp.ne.s32.totalorder %s114, %s116
      %p120 = scmp.eq.s32.totalorder %s17, 0
      %p121 = por %p119, %p120
      %p122 = scmp.ne.s32.totalorder %s114, %s116
      %p123 = scmp.eq.s32.totalorder %s22, 1
      %p124 = por %p122, %p123
      %p125 = scmp.ne.s32.totalorder %s116, %s117
      %p126 = scmp.eq.s32.totalorder %s22, 0
      %p127 = por %p125, %p126
      %p128 = scmp.ne.s32.totalorder %s116, %s117
      %p129 = scmp.eq.s32.totalorder %s23, 1
      %p130 = por %p128, %p129
      %p132 = scmp.ne.s32.totalorder %s117, %s131
      %p133 = scmp.eq.s32.totalorder %s23, 0
      %p134 = por %p132, %p133
      %s136 = sadd.s32 %s135, 1
      %p139 = scmp.eq.s32.totalorder %s17, 1
      %p140 = scmp.ne.s32.totalorder %s135, %s137
      %p141 = scmp.eq.s32.totalorder %s17, 0
      %p142 = por %p140, %p141
      %p143 = scmp.ne.s32.totalorder %s135, %s137
      %p144 = scmp.eq.s32.totalorder %s22, 1
      %p145 = por %p143, %p144
      %p146 = scmp.ne.s32.totalorder %s137, %s138
      %p147 = scmp.eq.s32.totalorder %s22, 0
      %p148 = por %p146, %p147
      %p149 = scmp.ne.s32.totalorder %s137, %s138
      %p150 = scmp.eq.s32.totalorder %s23, 1
      %p151 = por %p149, %p150
      %p153 = scmp.ne.s32.totalorder %s138, %s152
      %p154 = scmp.eq.s32.totalorder %s23, 0
      %p155 = por %p153, %p154
      %s157 = sadd.s32 %s156, 1
      %p160 = scmp.eq.s32.totalorder %s17, 1
      %p161 = scmp.ne.s32.totalorder %s156, %s158
      %p162 = scmp.eq.s32.totalorder %s17, 0
      %p163 = por %p161, %p162
      %p164 = scmp.ne.s32.totalorder %s156, %s158
      %p165 = scmp.eq.s32.totalorder %s22, 1
      %p166 = por %p164, %p165
      %p167 = scmp.ne.s32.totalorder %s158, %s159
      %p168 = scmp.eq.s32.totalorder %s22, 0
      %p169 = por %p167, %p168
      %p170 = scmp.ne.s32.totalorder %s158, %s159
      %p171 = scmp.eq.s32.totalorder %s23, 1
      %p172 = por %p170, %p171
      %p174 = scmp.ne.s32.totalorder %s159, %s173
      %p175 = scmp.eq.s32.totalorder %s23, 0
      %p176 = por %p174, %p175
      %s178 = sadd.s32 %s177, 1
      %p181 = scmp.eq.s32.totalorder %s17, 1
      %p182 = scmp.ne.s32.totalorder %s177, %s179
      %p183 = scmp.eq.s32.totalorder %s17, 0
      %p184 = por %p182, %p183
      %p185 = scmp.ne.s32.totalorder %s177, %s179
      %p186 = scmp.eq.s32.totalorder %s22, 1
      %p187 = por %p185, %p186
      %p188 = scmp.ne.s32.totalorder %s179, %s180
      %p189 = scmp.eq.s32.totalorder %s22, 0
      %p190 = por %p188, %p189
      %p191 = scmp.ne.s32.totalorder %s179, %s180
      %p192 = scmp.eq.s32.totalorder %s23, 1
      %p193 = por %p191, %p192
      %p195 = scmp.ne.s32.totalorder %s180, %s194
      %p196 = scmp.eq.s32.totalorder %s23, 0
      %p197 = por %p195, %p196
      %s198 = ssub.s32 %s17, %s24
      %p199 = scmp.eq.s32.totalorder %s198, 0
      %s201 = sadd.s32 %s200, 1
      %s202 = scalar_select %p199, %s200, %s201
      %p205 = pneg %p199
      %p206 = scmp.eq.s32.totalorder %s17, 1
      %p207 = por %p205, %p206
      %p208 = scmp.ne.s32.totalorder %s200, %s203
      %p209 = scmp.eq.s32.totalorder %s17, 0
      %p210 = por %p208, %p209
      %p211 = scmp.ne.s32.totalorder %s200, %s203
      %p212 = scmp.eq.s32.totalorder %s22, 1
      %p213 = por %p211, %p212
      %p214 = scmp.ne.s32.totalorder %s203, %s204
      %p215 = scmp.eq.s32.totalorder %s22, 0
      %p216 = por %p214, %p215
      %p217 = scmp.ne.s32.totalorder %s203, %s204
      %p218 = scmp.eq.s32.totalorder %s23, 1
      %p219 = por %p217, %p218
      %p221 = scmp.ne.s32.totalorder %s204, %s220
      %p222 = scmp.eq.s32.totalorder %s23, 0
      %p223 = por %p221, %p222
      %p224 = scmp.le.s32.totalorder 1, %s17
      %p225 = scmp.lt.s32.totalorder %s17, 3
      %p226 = pnand %p224, %p225
      %p227 = pneg %p226
      // Predicated region
      $region9: #{tpu_custom_call.1} parent=5 // pred_check
        _
      $region10: #{tpu_custom_call.1} parent=5 // pred_check_branch
        %229 = sbr.rel (%p226) target = $region12
      $region11: #{tpu_custom_call.1} parent=5 // pred_region
        %s230 = ssub.s32 %s17, 1
        // Predicated region
        $region13: #{tpu_custom_call.1} parent=11 // pred_check
          %p231 = pneg %p64
        $region14: #{tpu_custom_call.1} parent=11 // pred_check_branch
          %233 = sbr.rel (%p231) target = $region16
        $region15: #{tpu_custom_call.1} parent=11 // pred_region
          _
        $region16: #{tpu_custom_call.1} parent=11 // pred_fallthru
          _
        // Predicated region
        $region17: #{tpu_custom_call.1} parent=11 // pred_check
          %p234 = pneg %p85
        $region18: #{tpu_custom_call.1} parent=11 // pred_check_branch
          %236 = sbr.rel (%p234) target = $region20
        $region19: #{tpu_custom_call.1} parent=11 // pred_region
          _
        $region20: #{tpu_custom_call.1} parent=11 // pred_fallthru
          _
        // Predicated region
        $region21: #{tpu_custom_call.1} parent=11 // pred_check
          %p237 = pneg %p106
        $region22: #{tpu_custom_call.1} parent=11 // pred_check_branch
          %239 = sbr.rel (%p237) target = $region24
        $region23: #{tpu_custom_call.1} parent=11 // pred_region
          _
        $region24: #{tpu_custom_call.1} parent=11 // pred_fallthru
          _
        // Predicated region
        $region25: #{tpu_custom_call.1} parent=11 // pred_check
          %p240 = pneg %p127
        $region26: #{tpu_custom_call.1} parent=11 // pred_check_branch
          %242 = sbr.rel (%p240) target = $region28
        $region27: #{tpu_custom_call.1} parent=11 // pred_region
          _
        $region28: #{tpu_custom_call.1} parent=11 // pred_fallthru
          _
        // Predicated region
        $region29: #{tpu_custom_call.1} parent=11 // pred_check
          %p243 = pneg %p148
        $region30: #{tpu_custom_call.1} parent=11 // pred_check_branch
          %245 = sbr.rel (%p243) target = $region32
        $region31: #{tpu_custom_call.1} parent=11 // pred_region
          _
        $region32: #{tpu_custom_call.1} parent=11 // pred_fallthru
          _
        // Predicated region
        $region33: #{tpu_custom_call.1} parent=11 // pred_check
          %p246 = pneg %p169
        $region34: #{tpu_custom_call.1} parent=11 // pred_check_branch
          %248 = sbr.rel (%p246) target = $region36
        $region35: #{tpu_custom_call.1} parent=11 // pred_region
          _
        $region36: #{tpu_custom_call.1} parent=11 // pred_fallthru
          _
        // Predicated region
        $region37: #{tpu_custom_call.1} parent=11 // pred_check
          %p249 = pneg %p190
        $region38: #{tpu_custom_call.1} parent=11 // pred_check_branch
          %251 = sbr.rel (%p249) target = $region40
        $region39: #{tpu_custom_call.1} parent=11 // pred_region
          _
        $region40: #{tpu_custom_call.1} parent=11 // pred_fallthru
          _
      $region12: #{tpu_custom_call.1} parent=5 // pred_fallthru
        _
      %p252 = scmp.lt.s32.totalorder %s17, 2
      // Predicated region
      $region41: #{tpu_custom_call.1} parent=5 // pred_check
        %p253 = pneg %p252
      $region42: #{tpu_custom_call.1} parent=5 // pred_check_branch
        %255 = sbr.rel (%p253) target = $region44
      $region43: #{tpu_custom_call.1} parent=5 // pred_region
        // Predicated region
        $region45: #{tpu_custom_call.1} parent=43 // pred_check
          %p256 = pneg %p37
        $region46: #{tpu_custom_call.1} parent=43 // pred_check_branch
          %258 = sbr.rel (%p256) target = $region48
        $region47: #{tpu_custom_call.1} parent=43 // pred_region
          %p259 = scmp.lt.s32.totalorder %s17, 1
          %s260 = scalar_select %p259, %s17, 1
          %s261 = smul.addr %s260, 2
          %s262 = smul.addr %s261, 8
          %s263 = scalar_lea.vmem %s0, %s262
        $region48: #{tpu_custom_call.1} parent=43 // pred_fallthru
          _
      $region44: #{tpu_custom_call.1} parent=5 // pred_fallthru
        _
      %p264 = scmp.le.s32.totalorder 1, %s17
      %p265 = scmp.lt.s32.totalorder %s17, 3
      %p266 = pnand %p264, %p265
      %p267 = pneg %p266
      // Predicated region
      $region49: #{tpu_custom_call.1} parent=5 // pred_check
        _
      $region50: #{tpu_custom_call.1} parent=5 // pred_check_branch
        %269 = sbr.rel (%p266) target = $region52
      $region51: #{tpu_custom_call.1} parent=5 // pred_region
        %s270 = ssub.s32 %s17, 1
        %p271 = scmp.lt.s32.totalorder %s22, 1
        %s272 = scalar_select %p271, %s22, 1
        %s273 = smul.addr %s272, 2
        %s274 = smul.addr %s273, 8
        %s275 = scalar_lea.vmem %s0, %s274
        %p276 = pneg %p43
        %p277 = pneg %p40
        %p278 = pneg %p64
        %p279 = pneg %p61
        %p280 = pneg %p85
        %p281 = pneg %p82
        %p282 = pneg %p106
        %p283 = pneg %p103
        %p284 = pneg %p127
        %p285 = pneg %p124
        %p286 = pneg %p148
        %p287 = pneg %p145
        %p288 = pneg %p169
        %p289 = pneg %p166
        %p290 = pneg %p190
        %p291 = pneg %p187
        %p292 = pneg %p216
        %p293 = pneg %p213
        %s294 = sand.u32 %s203, 1
        %s295 = scalar_lea.sflag [#allocation3], %s294
        %s296 = sand.u32 %s203, 1
        %s297 = smul.addr %s296, 16
        %s298 = scalar_lea.vmem [#allocation2], %s297
        %p299 = scmp.lt.s32.totalorder %s22, 1
        %s300 = scalar_select %p299, %s22, 1
        %s301 = smul.addr %s300, 2
        %s302 = smul.addr %s301, 8
        %s303 = scalar_lea.vmem %s0, %s302
        %v304 = vld [vmem:[%s303] sm:$0xff]
        %v305 = vld [vmem:[%s303 + $0x8] sm:$0xff]
        %v306 = vld [vmem:[%s1] sm:$0xff]
        %v307 = vld [vmem:[%s1 + $0x8] sm:$0xff]
        %v308 = vld [vmem:[%s1 + $0x10] sm:$0xff]
        %v309 = vld [vmem:[%s1 + $0x18] sm:$0xff]
        %v310 = vld [vmem:[%s1 + $0x20] sm:$0xff]
        %v311 = vld [vmem:[%s1 + $0x28] sm:$0xff]
        %v312 = vld [vmem:[%s1 + $0x30] sm:$0xff]
        %v313 = vld [vmem:[%s1 + $0x38] sm:$0xff]
        %315 = vset.pattern.permute.xlu0 0
        %316 = vperm.xlu0 %315, %v306
        %v317 = vpop.permute.xlu0 %316
        %v319 = vlaneseq
        %v320 = vshrl.u32 %v319, 7
        %v321 = vsub.s32 0, %v320
        %v322 = vrot.slane %v304, %v321
        %v323 = vlaneseq
        %v324 = vshrl.u32 %v323, 7
        %v325 = vsub.s32 0, %v324
        %v326 = vrot.slane %v305, %v325
        %v327 = vmul.f32 %v317, %v322
        %v328 = vmul.f32 %v317, %v326
        %330 = vset.pattern.permute.xlu0 0
        %331 = vperm.xlu0 %330, %v307
        %v332 = vpop.permute.xlu0 %331
        %v334 = vlaneseq
        %v335 = vshrl.u32 %v334, 7
        %v336 = vsub.s32 1, %v335
        %v337 = vrot.slane %v304, %v336
        %v338 = vlaneseq
        %v339 = vshrl.u32 %v338, 7
        %v340 = vsub.s32 1, %v339
        %v341 = vrot.slane %v305, %v340
        %v342 = vmul.f32 %v332, %v337
        %v343 = vmul.f32 %v332, %v341
        %v344 = vadd.f32 %v327, %v342
        %v345 = vadd.f32 %v328, %v343
        %347 = vset.pattern.permute.xlu0 0
        %348 = vperm.xlu0 %347, %v308
        %v349 = vpop.permute.xlu0 %348
        %v351 = vlaneseq
        %v352 = vshrl.u32 %v351, 7
        %v353 = vsub.s32 2, %v352
        %v354 = vrot.slane %v304, %v353
        %v355 = vlaneseq
        %v356 = vshrl.u32 %v355, 7
        %v357 = vsub.s32 2, %v356
        %v358 = vrot.slane %v305, %v357
        %v359 = vmul.f32 %v349, %v354
        %v360 = vmul.f32 %v349, %v358
        %v361 = vadd.f32 %v344, %v359
        %v362 = vadd.f32 %v345, %v360
        %364 = vset.pattern.permute.xlu0 0
        %365 = vperm.xlu0 %364, %v309
        %v366 = vpop.permute.xlu0 %365
        %v368 = vlaneseq
        %v369 = vshrl.u32 %v368, 7
        %v370 = vsub.s32 3, %v369
        %v371 = vrot.slane %v304, %v370
        %v372 = vlaneseq
        %v373 = vshrl.u32 %v372, 7
        %v374 = vsub.s32 3, %v373
        %v375 = vrot.slane %v305, %v374
        %v376 = vmul.f32 %v366, %v371
        %v377 = vmul.f32 %v366, %v375
        %v378 = vadd.f32 %v361, %v376
        %v379 = vadd.f32 %v362, %v377
        %381 = vset.pattern.permute.xlu0 0
        %382 = vperm.xlu0 %381, %v310
        %v383 = vpop.permute.xlu0 %382
        %v385 = vlaneseq
        %v386 = vshrl.u32 %v385, 7
        %v387 = vsub.s32 4, %v386
        %v388 = vrot.slane %v304, %v387
        %v389 = vlaneseq
        %v390 = vshrl.u32 %v389, 7
        %v391 = vsub.s32 4, %v390
        %v392 = vrot.slane %v305, %v391
        %v393 = vmul.f32 %v383, %v388
        %v394 = vmul.f32 %v383, %v392
        %v395 = vadd.f32 %v378, %v393
        %v396 = vadd.f32 %v379, %v394
        %398 = vset.pattern.permute.xlu0 0
        %399 = vperm.xlu0 %398, %v311
        %v400 = vpop.permute.xlu0 %399
        %v402 = vlaneseq
        %v403 = vshrl.u32 %v402, 7
        %v404 = vsub.s32 5, %v403
        %v405 = vrot.slane %v304, %v404
        %v406 = vlaneseq
        %v407 = vshrl.u32 %v406, 7
        %v408 = vsub.s32 5, %v407
        %v409 = vrot.slane %v305, %v408
        %v410 = vmul.f32 %v400, %v405
        %v411 = vmul.f32 %v400, %v409
        %v412 = vadd.f32 %v395, %v410
        %v413 = vadd.f32 %v396, %v411
        %415 = vset.pattern.permute.xlu0 0
        %416 = vperm.xlu0 %415, %v312
        %v417 = vpop.permute.xlu0 %416
        %v419 = vlaneseq
        %v420 = vshrl.u32 %v419, 7
        %v421 = vsub.s32 6, %v420
        %v422 = vrot.slane %v304, %v421
        %v423 = vlaneseq
        %v424 = vshrl.u32 %v423, 7
        %v425 = vsub.s32 6, %v424
        %v426 = vrot.slane %v305, %v425
        %v427 = vmul.f32 %v417, %v422
        %v428 = vmul.f32 %v417, %v426
        %v429 = vadd.f32 %v412, %v427
        %v430 = vadd.f32 %v413, %v428
        %432 = vset.pattern.permute.xlu0 0
        %433 = vperm.xlu0 %432, %v313
        %v434 = vpop.permute.xlu0 %433
        %v436 = vlaneseq
        %v437 = vshrl.u32 %v436, 7
        %v438 = vsub.s32 7, %v437
        %v439 = vrot.slane %v304, %v438
        %v440 = vlaneseq
        %v441 = vshrl.u32 %v440, 7
        %v442 = vsub.s32 7, %v441
        %v443 = vrot.slane %v305, %v442
        %v444 = vmul.f32 %v434, %v439
        %v445 = vmul.f32 %v434, %v443
        %v446 = vadd.f32 %v429, %v444
        %v447 = vadd.f32 %v430, %v445
        %v448 = vld [vmem:[%s2] sm:$0xff]
        %450 = vset.pattern.permute.xlu0 0
        %451 = vperm.xlu0 %450, %v448
        %v452 = vpop.permute.xlu0 %451
        %v454 = vadd.f32 %v446, %v452
        %v455 = vadd.f32 %v447, %v452
        %v456 = vmax.f32 %v454, 0.0
        %v457 = vmax.f32 %v455, 0.0
        %v458 = vld [vmem:[%s3] sm:$0xf]
        %v462 = vcombine.low 0.0, %v456
        %v464 = vunpack.c.l.s4 1983009808
        %v465 = vunpack.c.0.s8 %v464
        %v466 = vlaneseq
        %v467 = vshrl.u32 %v466, 7
        %v468 = vsub.s32 %v465, %v467
        %v469 = vrot.slane %v462, %v468
        %v471 = vunpack.c.l.s4 1983009808
        %v472 = vunpack.c.0.s8 %v471
        %v473 = vlaneseq
        %v474 = vshrl.u32 %v473, 7
        %v475 = vsub.s32 %v472, %v474
        %v476 = vrot.slane %v457, %v475
        %v477 = vcombine.low %v469, %v476
        %478 = vrot.lane.b32.xlu0 %v477, 17
        %v479 = vpop.permute.xlu0 %478
        %v480 = vrot.slane %v479, 2
        %vm481 = vcmask 138240
        %v482 = vsel %vm481, %v479, %v480
        %v484 = vmul.f32 %v458, %v482
        %v485 = vadd.f32 %v484, 0.0
        %s486 = scalar_lea.vmem %s3, 4
        %v487 = vld [vmem:[%s486] sm:$0xf]
        %488 = vrot.lane.b32.xlu0 %v477, 16
        %v489 = vpop.permute.xlu0 %488
        %v490 = vrot.slane %v489, 2
        %vm491 = vcmask 130048
        %v492 = vsel %vm491, %v489, %v490
        %v494 = vmul.f32 %v487, %v492
        %v495 = vadd.f32 %v485, %v494
        %s496 = scalar_lea.vmem %s3, 8
        %v497 = vld [vmem:[%s496] sm:$0xf]
        %498 = vrot.lane.b32.xlu0 %v477, 15
        %v499 = vpop.permute.xlu0 %498
        %v500 = vrot.slane %v499, 2
        %vm501 = vcmask 121856
        %v502 = vsel %vm501, %v499, %v500
        %v504 = vmul.f32 %v497, %v502
        %v505 = vadd.f32 %v495, %v504
        %s506 = scalar_lea.vmem %s3, 12
        %v507 = vld [vmem:[%s506] sm:$0xf]
        %508 = vrot.lane.b32.xlu0 %v477, 1
        %v509 = vpop.permute.xlu0 %508
        %v510 = vrot.slane %v509, 2
        %vm511 = vcmask 7168
        %v512 = vsel %vm511, %v509, %v510
        %v514 = vmul.f32 %v507, %v512
        %v515 = vadd.f32 %v505, %v514
        %s516 = scalar_lea.vmem %s3, 16
        %v517 = vld [vmem:[%s516] sm:$0xf]
        %v518 = vcombine.low %v456, %v457
        %v520 = vunpack.c.l.s4 1983009808
        %v521 = vunpack.c.0.s8 %v520
        %v522 = vlaneseq
        %v523 = vshrl.u32 %v522, 7
        %v524 = vsub.s32 %v521, %v523
        %v525 = vrot.slane %v518, %v524
        %v527 = vmul.f32 %v517, %v525
        %v528 = vadd.f32 %v515, %v527
        %s529 = scalar_lea.vmem %s3, 20
        %v530 = vld [vmem:[%s529] sm:$0xf]
        %v532 = vunpack.c.l.s4 1983009808
        %v533 = vunpack.c.0.s8 %v532
        %v534 = vlaneseq
        %v535 = vshrl.u32 %v534, 7
        %v536 = vsub.s32 %v533, %v535
        %v537 = vrot.slane 0.0, %v536
        %v538 = vcombine.low %v525, %v537
        %539 = vrot.lane.b32.xlu0 %v538, 127
        %v540 = vpop.permute.xlu0 %539
        %v541 = vrot.slane %v540, 2
        %vm542 = vcmask 1039360
        %v543 = vsel %vm542, %v540, %v541
        %v545 = vmul.f32 %v530, %v543
        %v546 = vadd.f32 %v528, %v545
        %s547 = scalar_lea.vmem %s3, 24
        %v548 = vld [vmem:[%s547] sm:$0xf]
        %549 = vrot.lane.b32.xlu0 %v538, 113
        %v550 = vpop.permute.xlu0 %549
        %v551 = vrot.slane %v550, 2
        %vm552 = vcmask 924672
        %v553 = vsel %vm552, %v550, %v551
        %v555 = vmul.f32 %v548, %v553
        %v556 = vadd.f32 %v546, %v555
        %s557 = scalar_lea.vmem %s3, 28
        %v558 = vld [vmem:[%s557] sm:$0xf]
        %559 = vrot.lane.b32.xlu0 %v538, 112
        %v560 = vpop.permute.xlu0 %559
        %v561 = vrot.slane %v560, 2
        %vm562 = vcmask 916480
        %v563 = vsel %vm562, %v560, %v561
        %v565 = vmul.f32 %v558, %v563
        %v566 = vadd.f32 %v556, %v565
        %s567 = scalar_lea.vmem %s3, 32
        %v568 = vld [vmem:[%s567] sm:$0xf]
        %569 = vrot.lane.b32.xlu0 %v538, 111
        %v570 = vpop.permute.xlu0 %569
        %v571 = vrot.slane %v570, 2
        %vm572 = vcmask 908288
        %v573 = vsel %vm572, %v570, %v571
        %v575 = vmul.f32 %v568, %v573
        %v576 = vadd.f32 %v566, %v575
        %v577 = vld [vmem:[%s4] sm:$0x3]
        %579 = vset.pattern.permute.xlu0 0
        %580 = vperm.xlu0 %579, %v577
        %v581 = vpop.permute.xlu0 %580
        %v583 = vunpack.c.l.s4 269488144
        %v584 = vunpack.c.0.s8 %v583
        %v585 = vlaneseq
        %v586 = vshrl.u32 %v585, 7
        %v587 = vsub.s32 %v584, %v586
        %v588 = vrot.slane %v581, %v587
        %v590 = vadd.f32 %v576, %v588
        %v591 = vmax.f32 %v590, 0.0
        %v593 = vcombine.low %v591, %v591
        %v595 = vunpack.c.l.s4 1983009808
        %v596 = vunpack.c.0.s8 %v595
        %v597 = vlaneseq
        %v598 = vshrl.u32 %v597, 7
        %v599 = vsub.s32 %v596, %v598
        %v600 = vrot.slane %v593, %v599
        %v601 = vcombine.high %v600, %v600
        %v604 = vadd.f32 %v456, %v600
        %v605 = vadd.f32 %v457, %v601
        %v608 = vrot.slane %v604, 2
        %v609 = vrot.slane %v605, 2
        %s610 = scalar_lea.vmem %s3, 36
        %v611 = vld [vmem:[%s610] sm:$0xf]
        %v612 = vcombine.low 0.0, %v608
        %v614 = vunpack.c.l.s4 1983009808
        %v615 = vunpack.c.0.s8 %v614
        %v616 = vlaneseq
        %v617 = vshrl.u32 %v616, 7
        %v618 = vsub.s32 %v615, %v617
        %v619 = vrot.slane %v612, %v618
        %v621 = vunpack.c.l.s4 1983009808
        %v622 = vunpack.c.0.s8 %v621
        %v623 = vlaneseq
        %v624 = vshrl.u32 %v623, 7
        %v625 = vsub.s32 %v622, %v624
        %v626 = vrot.slane %v609, %v625
        %v627 = vcombine.low %v619, %v626
        %628 = vrot.lane.b32.xlu0 %v627, 17
        %v629 = vpop.permute.xlu0 %628
        %v630 = vrot.slane %v629, 2
        %v631 = vsel %vm481, %v629, %v630
        %v633 = vmul.f32 %v611, %v631
        %v634 = vadd.f32 %v633, 0.0
        %s635 = scalar_lea.vmem %s3, 40
        %v636 = vld [vmem:[%s635] sm:$0xf]
        %637 = vrot.lane.b32.xlu0 %v627, 16
        %v638 = vpop.permute.xlu0 %637
        %v639 = vrot.slane %v638, 2
        %v640 = vsel %vm491, %v638, %v639
        %v642 = vmul.f32 %v636, %v640
        %v643 = vadd.f32 %v634, %v642
        %s644 = scalar_lea.vmem %s3, 44
        %v645 = vld [vmem:[%s644] sm:$0xf]
        %646 = vrot.lane.b32.xlu0 %v627, 15
        %v647 = vpop.permute.xlu0 %646
        %v648 = vrot.slane %v647, 2
        %v649 = vsel %vm501, %v647, %v648
        %v651 = vmul.f32 %v645, %v649
        %v652 = vadd.f32 %v643, %v651
        %s653 = scalar_lea.vmem %s3, 48
        %v654 = vld [vmem:[%s653] sm:$0xf]
        %655 = vrot.lane.b32.xlu0 %v627, 1
        %v656 = vpop.permute.xlu0 %655
        %v657 = vrot.slane %v656, 2
        %v658 = vsel %vm511, %v656, %v657
        %v660 = vmul.f32 %v654, %v658
        %v661 = vadd.f32 %v652, %v660
        %s662 = scalar_lea.vmem %s3, 52
        %v663 = vld [vmem:[%s662] sm:$0xf]
        %v664 = vcombine.low %v604, %v605
        %v666 = vunpack.c.l.s4 1983009808
        %v667 = vunpack.c.0.s8 %v666
        %v668 = vlaneseq
        %v669 = vshrl.u32 %v668, 7
        %v670 = vsub.s32 %v667, %v669
        %v671 = vrot.slane %v664, %v670
        %v672 = vcombine.high %v671, %v671
        %v674 = vmul.f32 %v663, %v672
        %v675 = vadd.f32 %v661, %v674
        %s676 = scalar_lea.vmem %s3, 56
        %v677 = vld [vmem:[%s676] sm:$0xf]
        %v678 = vcombine.low %v608, %v609
        %v680 = vunpack.c.l.s4 1983009808
        %v681 = vunpack.c.0.s8 %v680
        %v682 = vlaneseq
        %v683 = vshrl.u32 %v682, 7
        %v684 = vsub.s32 %v681, %v683
        %v685 = vrot.slane %v678, %v684
        %v686 = vcombine.low %v685, %v537
        %687 = vrot.lane.b32.xlu0 %v686, 127
        %v688 = vpop.permute.xlu0 %687
        %v689 = vrot.slane %v688, 2
        %v690 = vsel %vm542, %v688, %v689
        %v692 = vmul.f32 %v677, %v690
        %v693 = vadd.f32 %v675, %v692
        %s694 = scalar_lea.vmem %s3, 60
        %v695 = vld [vmem:[%s694] sm:$0xf]
        %696 = vrot.lane.b32.xlu0 %v686, 113
        %v697 = vpop.permute.xlu0 %696
        %v698 = vrot.slane %v697, 2
        %v699 = vsel %vm552, %v697, %v698
        %v701 = vmul.f32 %v695, %v699
        %v702 = vadd.f32 %v693, %v701
        %s703 = scalar_lea.vmem %s3, 64
        %v704 = vld [vmem:[%s703] sm:$0xf]
        %705 = vrot.lane.b32.xlu0 %v686, 112
        %v706 = vpop.permute.xlu0 %705
        %v707 = vrot.slane %v706, 2
        %v708 = vsel %vm562, %v706, %v707
        %v710 = vmul.f32 %v704, %v708
        %v711 = vadd.f32 %v702, %v710
        %s712 = scalar_lea.vmem %s3, 68
        %v713 = vld [vmem:[%s712] sm:$0xf]
        %714 = vrot.lane.b32.xlu0 %v686, 111
        %v715 = vpop.permute.xlu0 %714
        %v716 = vrot.slane %v715, 2
        %v717 = vsel %vm572, %v715, %v716
        %v719 = vmul.f32 %v713, %v717
        %v720 = vadd.f32 %v711, %v719
        %s721 = scalar_lea.vmem %s4, 2
        %v722 = vld [vmem:[%s721] sm:$0x3]
        %724 = vset.pattern.permute.xlu0 0
        %725 = vperm.xlu0 %724, %v722
        %v726 = vpop.permute.xlu0 %725
        %v728 = vunpack.c.l.s4 269488144
        %v729 = vunpack.c.0.s8 %v728
        %v730 = vlaneseq
        %v731 = vshrl.u32 %v730, 7
        %v732 = vsub.s32 %v729, %v731
        %v733 = vrot.slane %v726, %v732
        %v735 = vadd.f32 %v720, %v733
        %v736 = vmax.f32 %v735, 0.0
        %v739 = vunpack.c.l.s4 1983009808
        %v740 = vunpack.c.0.s8 %v739
        %v741 = vlaneseq
        %v742 = vshrl.u32 %v741, 7
        %v743 = vsub.s32 %v740, %v742
        %v744 = vrot.slane %v736, %v743
        %v745 = vcombine.low %v744, %v744
        %v748 = vadd.f32 %v456, %v745
        %v749 = vadd.f32 %v457, %v744
        %v752 = vrot.slane %v748, 4
        %v753 = vrot.slane %v749, 4
        %s754 = scalar_lea.vmem %s3, 72
        %v755 = vld [vmem:[%s754] sm:$0xf]
        %v756 = vcombine.low 0.0, %v752
        %v758 = vunpack.c.l.s4 1983009808
        %v759 = vunpack.c.0.s8 %v758
        %v760 = vlaneseq
        %v761 = vshrl.u32 %v760, 7
        %v762 = vsub.s32 %v759, %v761
        %v763 = vrot.slane %v756, %v762
        %v765 = vunpack.c.l.s4 1983009808
        %v766 = vunpack.c.0.s8 %v765
        %v767 = vlaneseq
        %v768 = vshrl.u32 %v767, 7
        %v769 = vsub.s32 %v766, %v768
        %v770 = vrot.slane %v753, %v769
        %v771 = vcombine.low %v763, %v770
        %772 = vrot.lane.b32.xlu0 %v771, 17
        %v773 = vpop.permute.xlu0 %772
        %v774 = vrot.slane %v773, 2
        %v775 = vsel %vm481, %v773, %v774
        %v777 = vmul.f32 %v755, %v775
        %v778 = vadd.f32 %v777, 0.0
        %s779 = scalar_lea.vmem %s3, 76
        %v780 = vld [vmem:[%s779] sm:$0xf]
        %781 = vrot.lane.b32.xlu0 %v771, 16
        %v782 = vpop.permute.xlu0 %781
        %v783 = vrot.slane %v782, 2
        %v784 = vsel %vm491, %v782, %v783
        %v786 = vmul.f32 %v780, %v784
        %v787 = vadd.f32 %v778, %v786
        %s788 = scalar_lea.vmem %s3, 80
        %v789 = vld [vmem:[%s788] sm:$0xf]
        %790 = vrot.lane.b32.xlu0 %v771, 15
        %v791 = vpop.permute.xlu0 %790
        %v792 = vrot.slane %v791, 2
        %v793 = vsel %vm501, %v791, %v792
        %v795 = vmul.f32 %v789, %v793
        %v796 = vadd.f32 %v787, %v795
        %s797 = scalar_lea.vmem %s3, 84
        %v798 = vld [vmem:[%s797] sm:$0xf]
        %799 = vrot.lane.b32.xlu0 %v771, 1
        %v800 = vpop.permute.xlu0 %799
        %v801 = vrot.slane %v800, 2
        %v802 = vsel %vm511, %v800, %v801
        %v804 = vmul.f32 %v798, %v802
        %v805 = vadd.f32 %v796, %v804
        %s806 = scalar_lea.vmem %s3, 88
        %v807 = vld [vmem:[%s806] sm:$0xf]
        %v808 = vcombine.high %v748, %v749
        %v810 = vunpack.c.l.s4 1983009808
        %v811 = vunpack.c.0.s8 %v810
        %v812 = vlaneseq
        %v813 = vshrl.u32 %v812, 7
        %v814 = vsub.s32 %v811, %v813
        %v815 = vrot.slane %v808, %v814
        %v817 = vmul.f32 %v807, %v815
        %v818 = vadd.f32 %v805, %v817
        %s819 = scalar_lea.vmem %s3, 92
        %v820 = vld [vmem:[%s819] sm:$0xf]
        %v821 = vcombine.low %v752, %v753
        %v823 = vunpack.c.l.s4 1983009808
        %v824 = vunpack.c.0.s8 %v823
        %v825 = vlaneseq
        %v826 = vshrl.u32 %v825, 7
        %v827 = vsub.s32 %v824, %v826
        %v828 = vrot.slane %v821, %v827
        %v829 = vcombine.low %v828, %v537
        %830 = vrot.lane.b32.xlu0 %v829, 127
        %v831 = vpop.permute.xlu0 %830
        %v832 = vrot.slane %v831, 2
        %v833 = vsel %vm542, %v831, %v832
        %v835 = vmul.f32 %v820, %v833
        %v836 = vadd.f32 %v818, %v835
        %s837 = scalar_lea.vmem %s3, 96
        %v838 = vld [vmem:[%s837] sm:$0xf]
        %839 = vrot.lane.b32.xlu0 %v829, 113
        %v840 = vpop.permute.xlu0 %839
        %v841 = vrot.slane %v840, 2
        %v842 = vsel %vm552, %v840, %v841
        %v844 = vmul.f32 %v838, %v842
        %v845 = vadd.f32 %v836, %v844
        %s846 = scalar_lea.vmem %s3, 100
        %v847 = vld [vmem:[%s846] sm:$0xf]
        %848 = vrot.lane.b32.xlu0 %v829, 112
        %v849 = vpop.permute.xlu0 %848
        %v850 = vrot.slane %v849, 2
        %v851 = vsel %vm562, %v849, %v850
        %v853 = vmul.f32 %v847, %v851
        %v854 = vadd.f32 %v845, %v853
        %s855 = scalar_lea.vmem %s3, 104
        %v856 = vld [vmem:[%s855] sm:$0xf]
        %857 = vrot.lane.b32.xlu0 %v829, 111
        %v858 = vpop.permute.xlu0 %857
        %v859 = vrot.slane %v858, 2
        %v860 = vsel %vm572, %v858, %v859
        %v862 = vmul.f32 %v856, %v860
        %v863 = vadd.f32 %v854, %v862
        %s864 = scalar_lea.vmem %s4, 4
        %v865 = vld [vmem:[%s864] sm:$0x3]
        %867 = vset.pattern.permute.xlu0 0
        %868 = vperm.xlu0 %867, %v865
        %v869 = vpop.permute.xlu0 %868
        %v871 = vunpack.c.l.s4 269488144
        %v872 = vunpack.c.0.s8 %v871
        %v873 = vlaneseq
        %v874 = vshrl.u32 %v873, 7
        %v875 = vsub.s32 %v872, %v874
        %v876 = vrot.slane %v869, %v875
        %v878 = vadd.f32 %v863, %v876
        %v879 = vmax.f32 %v878, 0.0
        %v881 = vcombine.low %v879, %v879
        %v883 = vunpack.c.l.s4 1983009808
        %v884 = vunpack.c.0.s8 %v883
        %v885 = vlaneseq
        %v886 = vshrl.u32 %v885, 7
        %v887 = vsub.s32 %v884, %v886
        %v888 = vrot.slane %v881, %v887
        %v889 = vcombine.low %v888, %v888
        %v892 = vadd.f32 %v456, %v889
        %v893 = vadd.f32 %v457, %v888
        %v896 = vrot.slane %v892, 6
        %v897 = vrot.slane %v893, 6
        %s898 = scalar_lea.vmem %s3, 108
        %v899 = vld [vmem:[%s898] sm:$0xf]
        %v900 = vcombine.low 0.0, %v896
        %v902 = vunpack.c.l.s4 1983009808
        %v903 = vunpack.c.0.s8 %v902
        %v904 = vlaneseq
        %v905 = vshrl.u32 %v904, 7
        %v906 = vsub.s32 %v903, %v905
        %v907 = vrot.slane %v900, %v906
        %v909 = vunpack.c.l.s4 1983009808
        %v910 = vunpack.c.0.s8 %v909
        %v911 = vlaneseq
        %v912 = vshrl.u32 %v911, 7
        %v913 = vsub.s32 %v910, %v912
        %v914 = vrot.slane %v897, %v913
        %v915 = vcombine.low %v907, %v914
        %916 = vrot.lane.b32.xlu0 %v915, 17
        %v917 = vpop.permute.xlu0 %916
        %v918 = vrot.slane %v917, 2
        %v919 = vsel %vm481, %v917, %v918
        %v921 = vmul.f32 %v899, %v919
        %v922 = vadd.f32 %v921, 0.0
        %s923 = scalar_lea.vmem %s3, 112
        %v924 = vld [vmem:[%s923] sm:$0xf]
        %925 = vrot.lane.b32.xlu0 %v915, 16
        %v926 = vpop.permute.xlu0 %925
        %v927 = vrot.slane %v926, 2
        %v928 = vsel %vm491, %v926, %v927
        %v930 = vmul.f32 %v924, %v928
        %v931 = vadd.f32 %v922, %v930
        %s932 = scalar_lea.vmem %s3, 116
        %v933 = vld [vmem:[%s932] sm:$0xf]
        %934 = vrot.lane.b32.xlu0 %v915, 15
        %v935 = vpop.permute.xlu0 %934
        %v936 = vrot.slane %v935, 2
        %v937 = vsel %vm501, %v935, %v936
        %v939 = vmul.f32 %v933, %v937
        %v940 = vadd.f32 %v931, %v939
        %s941 = scalar_lea.vmem %s3, 120
        %v942 = vld [vmem:[%s941] sm:$0xf]
        %943 = vrot.lane.b32.xlu0 %v915, 1
        %v944 = vpop.permute.xlu0 %943
        %v945 = vrot.slane %v944, 2
        %v946 = vsel %vm511, %v944, %v945
        %v948 = vmul.f32 %v942, %v946
        %v949 = vadd.f32 %v940, %v948
        %s950 = scalar_lea.vmem %s3, 124
        %v951 = vld [vmem:[%s950] sm:$0xf]
        %v952 = vcombine.high %v892, %v893
        %v954 = vunpack.c.l.s4 1983009808
        %v955 = vunpack.c.0.s8 %v954
        %v956 = vlaneseq
        %v957 = vshrl.u32 %v956, 7
        %v958 = vsub.s32 %v955, %v957
        %v959 = vrot.slane %v952, %v958
        %v960 = vcombine.high %v959, %v959
        %v962 = vmul.f32 %v951, %v960
        %v963 = vadd.f32 %v949, %v962
        %s964 = scalar_lea.vmem %s3, 128
        %v965 = vld [vmem:[%s964] sm:$0xf]
        %v966 = vcombine.low %v896, %v897
        %v968 = vunpack.c.l.s4 1983009808
        %v969 = vunpack.c.0.s8 %v968
        %v970 = vlaneseq
        %v971 = vshrl.u32 %v970, 7
        %v972 = vsub.s32 %v969, %v971
        %v973 = vrot.slane %v966, %v972
        %v974 = vcombine.low %v973, %v537
        %975 = vrot.lane.b32.xlu0 %v974, 127
        %v976 = vpop.permute.xlu0 %975
        %v977 = vrot.slane %v976, 2
        %v978 = vsel %vm542, %v976, %v977
        %v980 = vmul.f32 %v965, %v978
        %v981 = vadd.f32 %v963, %v980
        %s982 = scalar_lea.vmem %s3, 132
        %v983 = vld [vmem:[%s982] sm:$0xf]
        %984 = vrot.lane.b32.xlu0 %v974, 113
        %v985 = vpop.permute.xlu0 %984
        %v986 = vrot.slane %v985, 2
        %v987 = vsel %vm552, %v985, %v986
        %v989 = vmul.f32 %v983, %v987
        %v990 = vadd.f32 %v981, %v989
        %s991 = scalar_lea.vmem %s3, 136
        %v992 = vld [vmem:[%s991] sm:$0xf]
        %993 = vrot.lane.b32.xlu0 %v974, 112
        %v994 = vpop.permute.xlu0 %993
        %v995 = vrot.slane %v994, 2
        %v996 = vsel %vm562, %v994, %v995
        %v998 = vmul.f32 %v992, %v996
        %v999 = vadd.f32 %v990, %v998
        %s1000 = scalar_lea.vmem %s3, 140
        %v1001 = vld [vmem:[%s1000] sm:$0xf]
        %1002 = vrot.lane.b32.xlu0 %v974, 111
        %v1003 = vpop.permute.xlu0 %1002
        %v1004 = vrot.slane %v1003, 2
        %v1005 = vsel %vm572, %v1003, %v1004
        %v1007 = vmul.f32 %v1001, %v1005
        %v1008 = vadd.f32 %v999, %v1007
        %s1009 = scalar_lea.vmem %s4, 6
        %v1010 = vld [vmem:[%s1009] sm:$0x3]
        %1012 = vset.pattern.permute.xlu0 0
        %1013 = vperm.xlu0 %1012, %v1010
        %v1014 = vpop.permute.xlu0 %1013
        %v1016 = vunpack.c.l.s4 269488144
        %v1017 = vunpack.c.0.s8 %v1016
        %v1018 = vlaneseq
        %v1019 = vshrl.u32 %v1018, 7
        %v1020 = vsub.s32 %v1017, %v1019
        %v1021 = vrot.slane %v1014, %v1020
        %v1023 = vadd.f32 %v1008, %v1021
        %v1024 = vmax.f32 %v1023, 0.0
        %v1025 = vld [vmem:[%s5] sm:$0xff]
        %v1026 = vld [vmem:[%s5 + $0x8] sm:$0xff]
        %v1027 = vld [vmem:[%s5 + $0x10] sm:$0xff]
        %v1028 = vld [vmem:[%s5 + $0x18] sm:$0xff]
        %v1029 = vld [vmem:[%s5 + $0x20] sm:$0xff]
        %v1030 = vld [vmem:[%s5 + $0x28] sm:$0xff]
        %v1031 = vld [vmem:[%s5 + $0x30] sm:$0xff]
        %v1032 = vld [vmem:[%s5 + $0x38] sm:$0xff]
        %1034 = vset.pattern.permute.xlu0 0
        %1035 = vperm.xlu0 %1034, %v1025
        %v1036 = vpop.permute.xlu0 %1035
        %v1038 = vlaneseq
        %v1039 = vshrl.u32 %v1038, 7
        %v1040 = vsub.s32 0, %v1039
        %v1041 = vrot.slane %v591, %v1040
        %v1042 = vlaneseq
        %v1043 = vshrl.u32 %v1042, 7
        %v1044 = vsub.s32 2, %v1043
        %v1045 = vrot.slane %v591, %v1044
        %v1048 = vlaneseq
        %v1049 = vshrl.u32 %v1048, 7
        %v1050 = vsub.s32 0, %v1049
        %v1051 = vrot.slane %v1041, %v1050
        %v1052 = vlaneseq
        %v1053 = vshrl.u32 %v1052, 7
        %v1054 = vsub.s32 0, %v1053
        %v1055 = vrot.slane %v1045, %v1054
        %v1056 = vmul.f32 %v1036, %v1051
        %v1057 = vmul.f32 %v1036, %v1055
        %1059 = vset.pattern.permute.xlu0 0
        %1060 = vperm.xlu0 %1059, %v1026
        %v1061 = vpop.permute.xlu0 %1060
        %v1063 = vlaneseq
        %v1064 = vshrl.u32 %v1063, 7
        %v1065 = vsub.s32 1, %v1064
        %v1066 = vrot.slane %v591, %v1065
        %v1067 = vlaneseq
        %v1068 = vshrl.u32 %v1067, 7
        %v1069 = vsub.s32 3, %v1068
        %v1070 = vrot.slane %v591, %v1069
        %v1073 = vlaneseq
        %v1074 = vshrl.u32 %v1073, 7
        %v1075 = vsub.s32 1, %v1074
        %v1076 = vrot.slane %v1066, %v1075
        %v1077 = vlaneseq
        %v1078 = vshrl.u32 %v1077, 7
        %v1079 = vsub.s32 1, %v1078
        %v1080 = vrot.slane %v1070, %v1079
        %v1081 = vmul.f32 %v1061, %v1076
        %v1082 = vmul.f32 %v1061, %v1080
        %v1083 = vadd.f32 %v1056, %v1081
        %v1084 = vadd.f32 %v1057, %v1082
        %1086 = vset.pattern.permute.xlu0 0
        %1087 = vperm.xlu0 %1086, %v1027
        %v1088 = vpop.permute.xlu0 %1087
        %v1090 = vlaneseq
        %v1091 = vshrl.u32 %v1090, 7
        %v1092 = vsub.s32 0, %v1091
        %v1093 = vrot.slane %v736, %v1092
        %v1094 = vlaneseq
        %v1095 = vshrl.u32 %v1094, 7
        %v1096 = vsub.s32 2, %v1095
        %v1097 = vrot.slane %v736, %v1096
        %v1100 = vlaneseq
        %v1101 = vshrl.u32 %v1100, 7
        %v1102 = vsub.s32 0, %v1101
        %v1103 = vrot.slane %v1093, %v1102
        %v1104 = vlaneseq
        %v1105 = vshrl.u32 %v1104, 7
        %v1106 = vsub.s32 0, %v1105
        %v1107 = vrot.slane %v1097, %v1106
        %v1108 = vmul.f32 %v1088, %v1103
        %v1109 = vmul.f32 %v1088, %v1107
        %v1110 = vadd.f32 %v1083, %v1108
        %v1111 = vadd.f32 %v1084, %v1109
        %1113 = vset.pattern.permute.xlu0 0
        %1114 = vperm.xlu0 %1113, %v1028
        %v1115 = vpop.permute.xlu0 %1114
        %v1117 = vlaneseq
        %v1118 = vshrl.u32 %v1117, 7
        %v1119 = vsub.s32 1, %v1118
        %v1120 = vrot.slane %v736, %v1119
        %v1121 = vlaneseq
        %v1122 = vshrl.u32 %v1121, 7
        %v1123 = vsub.s32 3, %v1122
        %v1124 = vrot.slane %v736, %v1123
        %v1127 = vlaneseq
        %v1128 = vshrl.u32 %v1127, 7
        %v1129 = vsub.s32 1, %v1128
        %v1130 = vrot.slane %v1120, %v1129
        %v1131 = vlaneseq
        %v1132 = vshrl.u32 %v1131, 7
        %v1133 = vsub.s32 1, %v1132
        %v1134 = vrot.slane %v1124, %v1133
        %v1135 = vmul.f32 %v1115, %v1130
        %v1136 = vmul.f32 %v1115, %v1134
        %v1137 = vadd.f32 %v1110, %v1135
        %v1138 = vadd.f32 %v1111, %v1136
        %1140 = vset.pattern.permute.xlu0 0
        %1141 = vperm.xlu0 %1140, %v1029
        %v1142 = vpop.permute.xlu0 %1141
        %v1144 = vlaneseq
        %v1145 = vshrl.u32 %v1144, 7
        %v1146 = vsub.s32 0, %v1145
        %v1147 = vrot.slane %v879, %v1146
        %v1148 = vlaneseq
        %v1149 = vshrl.u32 %v1148, 7
        %v1150 = vsub.s32 2, %v1149
        %v1151 = vrot.slane %v879, %v1150
        %v1154 = vlaneseq
        %v1155 = vshrl.u32 %v1154, 7
        %v1156 = vsub.s32 0, %v1155
        %v1157 = vrot.slane %v1147, %v1156
        %v1158 = vlaneseq
        %v1159 = vshrl.u32 %v1158, 7
        %v1160 = vsub.s32 0, %v1159
        %v1161 = vrot.slane %v1151, %v1160
        %v1162 = vmul.f32 %v1142, %v1157
        %v1163 = vmul.f32 %v1142, %v1161
        %v1164 = vadd.f32 %v1137, %v1162
        %v1165 = vadd.f32 %v1138, %v1163
        %1167 = vset.pattern.permute.xlu0 0
        %1168 = vperm.xlu0 %1167, %v1030
        %v1169 = vpop.permute.xlu0 %1168
        %v1171 = vlaneseq
        %v1172 = vshrl.u32 %v1171, 7
        %v1173 = vsub.s32 1, %v1172
        %v1174 = vrot.slane %v879, %v1173
        %v1175 = vlaneseq
        %v1176 = vshrl.u32 %v1175, 7
        %v1177 = vsub.s32 3, %v1176
        %v1178 = vrot.slane %v879, %v1177
        %v1181 = vlaneseq
        %v1182 = vshrl.u32 %v1181, 7
        %v1183 = vsub.s32 1, %v1182
        %v1184 = vrot.slane %v1174, %v1183
        %v1185 = vlaneseq
        %v1186 = vshrl.u32 %v1185, 7
        %v1187 = vsub.s32 1, %v1186
        %v1188 = vrot.slane %v1178, %v1187
        %v1189 = vmul.f32 %v1169, %v1184
        %v1190 = vmul.f32 %v1169, %v1188
        %v1191 = vadd.f32 %v1164, %v1189
        %v1192 = vadd.f32 %v1165, %v1190
        %1194 = vset.pattern.permute.xlu0 0
        %1195 = vperm.xlu0 %1194, %v1031
        %v1196 = vpop.permute.xlu0 %1195
        %v1199 = vlaneseq
        %v1200 = vshrl.u32 %v1199, 7
        %v1201 = vsub.s32 0, %v1200
        %v1202 = vrot.slane %v1024, %v1201
        %v1203 = vlaneseq
        %v1204 = vshrl.u32 %v1203, 7
        %v1205 = vsub.s32 2, %v1204
        %v1206 = vrot.slane %v1024, %v1205
        %v1209 = vlaneseq
        %v1210 = vshrl.u32 %v1209, 7
        %v1211 = vsub.s32 0, %v1210
        %v1212 = vrot.slane %v1202, %v1211
        %v1213 = vlaneseq
        %v1214 = vshrl.u32 %v1213, 7
        %v1215 = vsub.s32 0, %v1214
        %v1216 = vrot.slane %v1206, %v1215
        %v1217 = vmul.f32 %v1196, %v1212
        %v1218 = vmul.f32 %v1196, %v1216
        %v1219 = vadd.f32 %v1191, %v1217
        %v1220 = vadd.f32 %v1192, %v1218
        %1222 = vset.pattern.permute.xlu0 0
        %1223 = vperm.xlu0 %1222, %v1032
        %v1224 = vpop.permute.xlu0 %1223
        %v1226 = vlaneseq
        %v1227 = vshrl.u32 %v1226, 7
        %v1228 = vsub.s32 1, %v1227
        %v1229 = vrot.slane %v1024, %v1228
        %v1230 = vlaneseq
        %v1231 = vshrl.u32 %v1230, 7
        %v1232 = vsub.s32 3, %v1231
        %v1233 = vrot.slane %v1024, %v1232
        %v1236 = vlaneseq
        %v1237 = vshrl.u32 %v1236, 7
        %v1238 = vsub.s32 1, %v1237
        %v1239 = vrot.slane %v1229, %v1238
        %v1240 = vlaneseq
        %v1241 = vshrl.u32 %v1240, 7
        %v1242 = vsub.s32 1, %v1241
        %v1243 = vrot.slane %v1233, %v1242
        %v1244 = vmul.f32 %v1224, %v1239
        %v1245 = vmul.f32 %v1224, %v1243
        %v1246 = vadd.f32 %v1219, %v1244
        %v1247 = vadd.f32 %v1220, %v1245
        %v1248 = vld [vmem:[%s6] sm:$0xff]
        %1250 = vset.pattern.permute.xlu0 0
        %1251 = vperm.xlu0 %1250, %v1248
        %v1252 = vpop.permute.xlu0 %1251
        %v1254 = vadd.f32 %v1246, %v1252
        %v1255 = vadd.f32 %v1247, %v1252
        %v1256 = vadd.f32 %v1254, %v1255
        %1257 = vadd.xlane.f32.xlu0 %v1256
        %v1258 = vpop.xlane.xlu0 %1257
        %v1259 = vrcp.pop 256.0
        %v1260 = vmul.f32 %v1258, %v1259
        %v1261 = vld [vmem:[%s7] sm:$0xff]
        %v1262 = vld [vmem:[%s7 + $0x8] sm:$0xff]
        %v1263 = vld [vmem:[%s7 + $0x10] sm:$0xff]
        %v1264 = vld [vmem:[%s7 + $0x18] sm:$0xff]
        %v1265 = vld [vmem:[%s7 + $0x20] sm:$0xff]
        %v1266 = vld [vmem:[%s7 + $0x28] sm:$0xff]
        %v1267 = vld [vmem:[%s7 + $0x30] sm:$0xff]
        %v1268 = vld [vmem:[%s7 + $0x38] sm:$0xff]
        %v1269 = vlaneseq
        %v1270 = vshrl.u32 %v1269, 7
        %v1271 = vsub.s32 0, %v1270
        %v1272 = vrot.slane %v1260, %v1271
        %v1273 = vmul.f32 %v1261, %v1272
        %v1274 = vlaneseq
        %v1275 = vshrl.u32 %v1274, 7
        %v1276 = vsub.s32 1, %v1275
        %v1277 = vrot.slane %v1260, %v1276
        %v1278 = vmul.f32 %v1262, %v1277
        %v1279 = vadd.f32 %v1273, %v1278
        %v1280 = vlaneseq
        %v1281 = vshrl.u32 %v1280, 7
        %v1282 = vsub.s32 2, %v1281
        %v1283 = vrot.slane %v1260, %v1282
        %v1284 = vmul.f32 %v1263, %v1283
        %v1285 = vadd.f32 %v1279, %v1284
        %v1286 = vlaneseq
        %v1287 = vshrl.u32 %v1286, 7
        %v1288 = vsub.s32 3, %v1287
        %v1289 = vrot.slane %v1260, %v1288
        %v1290 = vmul.f32 %v1264, %v1289
        %v1291 = vadd.f32 %v1285, %v1290
        %v1292 = vlaneseq
        %v1293 = vshrl.u32 %v1292, 7
        %v1294 = vsub.s32 4, %v1293
        %v1295 = vrot.slane %v1260, %v1294
        %v1296 = vmul.f32 %v1265, %v1295
        %v1297 = vadd.f32 %v1291, %v1296
        %v1298 = vlaneseq
        %v1299 = vshrl.u32 %v1298, 7
        %v1300 = vsub.s32 5, %v1299
        %v1301 = vrot.slane %v1260, %v1300
        %v1302 = vmul.f32 %v1266, %v1301
        %v1303 = vadd.f32 %v1297, %v1302
        %v1304 = vlaneseq
        %v1305 = vshrl.u32 %v1304, 7
        %v1306 = vsub.s32 6, %v1305
        %v1307 = vrot.slane %v1260, %v1306
        %v1308 = vmul.f32 %v1267, %v1307
        %v1309 = vadd.f32 %v1303, %v1308
        %v1310 = vlaneseq
        %v1311 = vshrl.u32 %v1310, 7
        %v1312 = vsub.s32 7, %v1311
        %v1313 = vrot.slane %v1260, %v1312
        %v1314 = vmul.f32 %v1268, %v1313
        %v1315 = vadd.f32 %v1309, %v1314
        %v1316 = vxor.u32 %v1315, 2147483648
        %v1317 = vmul.f32 %v1316, 1.442695
        %v1318 = vpow.pop %v1317
        %v1319 = vadd.f32 %v1318, 1.0
        %v1320 = vrcp.pop %v1319
        %v1321 = vmul.f32 1.0, %v1320
        %1323 = vset.pattern.permute.xlu0 0
        %1324 = vperm.xlu0 %1323, %v1321
        %v1325 = vpop.permute.xlu0 %1324
        %v1327 = vmul.f32 %v1254, %v1325
        %v1328 = vmul.f32 %v1255, %v1325
        %v1329 = vadd.f32 %v1327, %v304
        %v1330 = vadd.f32 %v1328, %v305
        %v1331 = vmax.f32 %v1329, 0.0
        %v1332 = vmax.f32 %v1330, 0.0
        %1333 = vst [vmem:[%s298] sm:$0xff] %v1331
        %1334 = vst [vmem:[%s298 + $0x8] sm:$0xff] %v1332
        %s1335 = sand.u32 %s203, 1
        %s1336 = scalar_lea.sflag [#allocation3], %s1335
        %s1337 = sand.u32 %s203, 1
        %s1338 = smul.addr %s1337, 16
        %s1339 = scalar_lea.vmem [#allocation2], %s1338
        // Predicated region
        $region53: #{tpu_custom_call.1} parent=51 // pred_check
          %p1340 = pneg %p213
        $region54: #{tpu_custom_call.1} parent=51 // pred_check_branch
          %1342 = sbr.rel (%p1340) target = $region56
        $region55: #{tpu_custom_call.1} parent=51 // pred_region
          %s1344 = ssub.s32 256, 256
          %1345 = vsyncadd %s1336, %s1344
          %s1346 = smul.addr %s22, 2
          %s1347 = smul.addr %s1346, 128
          %s1348 = scalar_lea.hbm %s8, %s1347
          %s1350 = sshll.u32 %s1339, 4
          %s1351 = int_to_ptr.vmem [resolvable:$true] %s1350
          %1353 = dma.vmem_to_hbm [thread:$0]  %s1351, 256, %s1348, %s1336
        $region56: #{tpu_custom_call.1} parent=51 // pred_fallthru
          _
      $region52: #{tpu_custom_call.1} parent=5 // pred_fallthru
        _
      %p1354 = scmp.le.s32.totalorder 2, %s17
      // Predicated region
      $region57: #{tpu_custom_call.1} parent=5 // pred_check
        %p1355 = pneg %p1354
      $region58: #{tpu_custom_call.1} parent=5 // pred_check_branch
        %1357 = sbr.rel (%p1355) target = $region60
      $region59: #{tpu_custom_call.1} parent=5 // pred_region
        %s1358 = ssub.s32 %s17, 2
        // Predicated region
        $region61: #{tpu_custom_call.1} parent=59 // pred_check
          %p1359 = pneg %p219
        $region62: #{tpu_custom_call.1} parent=59 // pred_check_branch
          %1361 = sbr.rel (%p1359) target = $region64
        $region63: #{tpu_custom_call.1} parent=59 // pred_region
          %s1362 = sand.u32 %s204, 1
          %s1363 = scalar_lea.sflag [#allocation3], %s1362
          %s1364 = sand.u32 %s204, 1
          %s1365 = smul.addr %s1364, 16
          %s1366 = scalar_lea.vmem [#allocation2], %s1365
          %1367 = dma.done %s1363, 256
        $region64: #{tpu_custom_call.1} parent=59 // pred_fallthru
          _
      $region60: #{tpu_custom_call.1} parent=5 // pred_fallthru
        _
    $region6: #{tpu_custom_call.1} parent=1 // loop_footer
      %s21 = sadd.s32 1, %s17
    $region7: #{tpu_custom_call.1} parent=1 // loop_footer_branch
      %16 = sbr.rel target = $region3
    $region8: #{tpu_custom_call.1} parent=1 // loop_exit
      _
    %1368 = vsyncpa [#allocation3], 1
    %s1369 = scalar_lea.sflag [#allocation3], 1
    %1370 = vsyncpa %s1369, 1

</llo_original>
